<compile_context>
chip_gen: v7x
topology: tpu7x:2x2x1
jax: 0.10.0
libtpu: 0.0.40
codegen_flags: <defaults>
</compile_context>

<pallas_src>
import functools
import math

import jax
import jax.numpy as jnp
from jax.experimental import pallas as pl
from jax.experimental.pallas import tpu as pltpu

EPS = 1e-5            # PyTorch BatchNorm2d default eps
EXPANSION = 4
LANE = 128            # channel dims padded to a multiple of the lane width
MAX_ROW_TILE = 256    # rows per grid step; fits VMEM on v5e/v6e/v7x
VMEM_LIMIT = 32 * 1024 * 1024


# ------------------------------ small helpers -------------------------------

def _round_up(x, m):
    return (x + m - 1) // m * m


def _tile_rows(m):
    """Pick a row tile (multiple of 16) and the padded row count."""
    tm = min(MAX_ROW_TILE, _round_up(m, 16))
    return tm, _round_up(m, tm)


def _pad2(a, rows, cols):
    return jnp.pad(a, ((0, rows - a.shape[0]), (0, cols - a.shape[1])))


def _pad1(v, n):
    return jnp.pad(v.astype(jnp.float32), (0, n - v.shape[0]))


def _y_stats_outs(mp, tm, t, c):
    """out_shape / out_specs for (y, per-tile col-sum, per-tile col-sumsq)."""
    shapes = [jax.ShapeDtypeStruct((mp, c), jnp.float32),
              jax.ShapeDtypeStruct((t, 8, c), jnp.float32),
              jax.ShapeDtypeStruct((t, 8, c), jnp.float32)]
    specs = [pl.BlockSpec((tm, c), lambda i: (i, 0)),
             pl.BlockSpec((1, 8, c), lambda i: (i, 0, 0)),
             pl.BlockSpec((1, 8, c), lambda i: (i, 0, 0))]
    return shapes, specs


def _bn_scale_shift(psum, psumsq, count, gamma_p, beta_p):
    """Fold per-tile partials into per-channel BN scale/shift (wrapper-side)."""
    total = jnp.sum(psum[:, 0, :], axis=0)
    total_sq = jnp.sum(psumsq[:, 0, :], axis=0)
    mean = total / count
    var = total_sq / count - mean * mean          # one-pass (biased) variance
    scale = gamma_p * jax.lax.rsqrt(var + EPS)
    shift = beta_p - mean * scale
    return scale.reshape(1, -1), shift.reshape(1, -1)


# ------------------------------ Pallas kernels -------------------------------

def _emit_y_and_stats(y, y_ref, s_ref, ss_ref):
    y_ref[...] = y
    c = y.shape[1]
    s_ref[...] = jnp.broadcast_to(jnp.sum(y, axis=0).reshape(1, 1, c),
                                  s_ref.shape)
    ss_ref[...] = jnp.broadcast_to(jnp.sum(y * y, axis=0).reshape(1, 1, c),
                                   ss_ref.shape)


def _mm_stats_kernel(x_ref, w_ref, y_ref, s_ref, ss_ref):
    """y = sum_t x[t] @ w[t] (bf16 in, f32 acc) + per-tile column sum/sumsq."""
    y = jnp.dot(x_ref[0], w_ref[0], preferred_element_type=jnp.float32)
    for t in range(1, x_ref.shape[0]):
        y = y + jnp.dot(x_ref[t], w_ref[t], preferred_element_type=jnp.float32)
    _emit_y_and_stats(y, y_ref, s_ref, ss_ref)


def _bn_relu_kernel(y_ref, s_ref, b_ref, o_ref):
    """o = relu(y * scale + shift) (BN folded to per-channel affine)."""
    o_ref[...] = jnp.maximum(y_ref[...] * s_ref[...] + b_ref[...], 0.0
                             ).astype(o_ref.dtype)


def _bn_mm_stats_kernel(*refs, has_proj, rows, needs_mask):
    """a2 = relu(bn2(y2)); y3 = a2 @ w3 (+ shortcut ysc = xs @ wsc) + stats."""
    if has_proj:
        (y2_ref, s2_ref, b2_ref, w3_ref, xs_ref, wsc_ref,
         y3_ref, s3_ref, ss3_ref, ysc_ref, ssc_ref, sssc_ref) = refs
    else:
        y2_ref, s2_ref, b2_ref, w3_ref, y3_ref, s3_ref, ss3_ref = refs

    a2 = jnp.maximum(y2_ref[...] * s2_ref[...] + b2_ref[...], 0.0)
    if needs_mask:
        # zero out padded rows (relu(shift) != 0) so BN3 statistics stay exact
        tm = a2.shape[0]
        row = (pl.program_id(0) * tm
               + jax.lax.broadcasted_iota(jnp.int32, a2.shape, 0))
        a2 = jnp.where(row < rows, a2, 0.0)

    y3 = jnp.dot(a2.astype(jnp.bfloat16), w3_ref[...],
                 preferred_element_type=jnp.float32)
    _emit_y_and_stats(y3, y3_ref, s3_ref, ss3_ref)
    if has_proj:
        ysc = jnp.dot(xs_ref[...], wsc_ref[...],
                      preferred_element_type=jnp.float32)
        _emit_y_and_stats(ysc, ysc_ref, ssc_ref, sssc_ref)


def _bn_add_relu_kernel(*refs, has_proj):
    """out = relu(bn3(y3) + shortcut) (shortcut = bn_sc(ysc) or identity x)."""
    if has_proj:
        y3_ref, s3_ref, b3_ref, ysc_ref, ssc_ref, bsc_ref, o_ref = refs
        sc = ysc_ref[...] * ssc_ref[...] + bsc_ref[...]
    else:
        y3_ref, s3_ref, b3_ref, xid_ref, o_ref = refs
        sc = xid_ref[...].astype(jnp.float32)
    out = y3_ref[...] * s3_ref[...] + b3_ref[...] + sc
    o_ref[...] = jnp.maximum(out, 0.0).astype(o_ref.dtype)


# --------------------------- pallas_call wrappers ----------------------------

def _compiler_params():
    return pltpu.CompilerParams(dimension_semantics=("parallel",),
                                vmem_limit_bytes=VMEM_LIMIT)


def _mm_stats(x3, w3, tm):
    """x3: (K, Mp, Cin) bf16, w3: (K, Cin, Cout) bf16 -> y (f32), partial stats."""
    k, mp, cin = x3.shape
    cout = w3.shape[2]
    t = mp // tm
    out_shapes, out_specs = _y_stats_outs(mp, tm, t, cout)
    flops = 2 * k * mp * cin * cout
    bytes_acc = (x3.size * 2 + w3.size * 2
                 + sum(math.prod(s.shape) * 4 for s in out_shapes))
    return pl.pallas_call(
        _mm_stats_kernel,
        out_shape=tuple(out_shapes),
        grid=(t,),
        in_specs=[pl.BlockSpec((k, tm, cin), lambda i: (0, i, 0)),
                  pl.BlockSpec((k, cin, cout), lambda i: (0, 0, 0))],
        out_specs=tuple(out_specs),
        compiler_params=_compiler_params(),
        cost_estimate=pl.CostEstimate(flops=flops, transcendentals=0,
                                      bytes_accessed=bytes_acc),
    )(x3, w3)


def _bn_relu(y, scale, shift, tm, out_dtype=jnp.bfloat16):
    mp, c = y.shape
    t = mp // tm
    row_spec = pl.BlockSpec((tm, c), lambda i: (i, 0))
    vec_spec = pl.BlockSpec((1, c), lambda i: (0, 0))
    return pl.pallas_call(
        _bn_relu_kernel,
        out_shape=jax.ShapeDtypeStruct((mp, c), out_dtype),
        grid=(t,),
        in_specs=[row_spec, vec_spec, vec_spec],
        out_specs=row_spec,
        compiler_params=_compiler_params(),
    )(y, scale, shift)


def _bn_mm_stats(y2, scale2, shift2, w3, xs, wsc, tm, m_real):
    mp, p = y2.shape
    o = w3.shape[1]
    t = mp // tm
    has_proj = xs is not None
    needs_mask = mp > m_real
    kern = functools.partial(_bn_mm_stats_kernel, has_proj=has_proj,
                             rows=m_real, needs_mask=needs_mask)
    row_spec = pl.BlockSpec((tm, p), lambda i: (i, 0))
    vec_spec = pl.BlockSpec((1, p), lambda i: (0, 0))
    in_specs = [row_spec, vec_spec, vec_spec,
                pl.BlockSpec((p, o), lambda i: (0, 0))]
    args = [y2, scale2, shift2, w3]
    out_shapes, out_specs = _y_stats_outs(mp, tm, t, o)
    flops = 2 * mp * p * o
    if has_proj:
        cin = xs.shape[1]
        in_specs += [pl.BlockSpec((tm, cin), lambda i: (i, 0)),
                     pl.BlockSpec((cin, o), lambda i: (0, 0))]
        args += [xs, wsc]
        extra_shapes, extra_specs = _y_stats_outs(mp, tm, t, o)
        out_shapes += extra_shapes
        out_specs += extra_specs
        flops += 2 * mp * cin * o
    bytes_acc = (sum(a.size * a.dtype.itemsize for a in args)
                 + sum(math.prod(s.shape) * 4 for s in out_shapes))
    return pl.pallas_call(
        kern,
        out_shape=tuple(out_shapes),
        grid=(t,),
        in_specs=in_specs,
        out_specs=tuple(out_specs),
        compiler_params=_compiler_params(),
        cost_estimate=pl.CostEstimate(flops=flops, transcendentals=0,
                                      bytes_accessed=bytes_acc),
    )(*args)


def _bn_add_relu(y3, s3, b3, sc_args, tm):
    mp, o = y3.shape
    t = mp // tm
    has_proj = len(sc_args) == 3
    kern = functools.partial(_bn_add_relu_kernel, has_proj=has_proj)
    row_spec = pl.BlockSpec((tm, o), lambda i: (i, 0))
    vec_spec = pl.BlockSpec((1, o), lambda i: (0, 0))
    if has_proj:
        in_specs = [row_spec, vec_spec, vec_spec, row_spec, vec_spec, vec_spec]
    else:
        in_specs = [row_spec, vec_spec, vec_spec, row_spec]
    return pl.pallas_call(
        kern,
        out_shape=jax.ShapeDtypeStruct((mp, o), jnp.float32),
        grid=(t,),
        in_specs=in_specs,
        out_specs=row_spec,
        compiler_params=_compiler_params(),
    )(y3, s3, b3, *sc_args)


# --------------------------------- forward -----------------------------------

def init_bottleneck_params(key, in_planes, planes, stride):
    """Deterministic synthetic parameters (matmul-ready, channels-last)."""
    out_planes = EXPANSION * planes
    ks = jax.random.split(key, 12)

    def conv_w(k, shape, fan_in):
        return jax.random.normal(k, shape, jnp.float32) / jnp.sqrt(float(fan_in))

    def bn_gb(kg, kb, c):
        return (1.0 + 0.1 * jax.random.normal(kg, (c,), jnp.float32),
                0.1 * jax.random.normal(kb, (c,), jnp.float32))

    p = {}
    p["w1"] = conv_w(ks[0], (in_planes, planes), in_planes)        # 1x1: (Cin, Cout)
    p["g1"], p["b1"] = bn_gb(ks[1], ks[2], planes)
    p["w2"] = conv_w(ks[3], (3, 3, planes, planes), 9 * planes)    # (KH, KW, Cin, Cout)
    p["g2"], p["b2"] = bn_gb(ks[4], ks[5], planes)
    p["w3"] = conv_w(ks[6], (planes, out_planes), planes)
    p["g3"], p["b3"] = bn_gb(ks[7], ks[8], out_planes)
    if stride != 1 or in_planes != out_planes:
        p["wsc"] = conv_w(ks[9], (in_planes, out_planes), in_planes)
        p["gsc"], p["bsc"] = bn_gb(ks[10], ks[11], out_planes)
    return p


def bottleneck_forward(x_nchw, params, planes, stride):
    out_planes = EXPANSION * planes
    n, cin, h, w = x_nchw.shape
    ho = (h - 1) // stride + 1
    wo = (w - 1) // stride + 1
    cin_p = _round_up(cin, LANE)
    p_p = _round_up(planes, LANE)
    o_p = _round_up(out_planes, LANE)

    x = jnp.transpose(x_nchw, (0, 2, 3, 1))                        # NHWC
    m1 = n * h * w
    m2 = n * ho * wo
    tm1, mp1 = _tile_rows(m1)
    tm2, mp2 = _tile_rows(m2)

    # conv1 (1x1) + bn1 + relu (two-pass BN: matmul+stats, then apply)
    x1 = _pad2(x.reshape(m1, cin), mp1, cin_p).astype(jnp.bfloat16)[None]
    w1 = _pad2(params["w1"], cin_p, p_p).astype(jnp.bfloat16)[None]
    y1, ps1, pss1 = _mm_stats(x1, w1, tm1)
    sc1, sh1 = _bn_scale_shift(ps1, pss1, m1,
                               _pad1(params["g1"], p_p), _pad1(params["b1"], p_p))
    a1 = _bn_relu(y1, sc1, sh1, tm1)                               # bf16

    # conv2 (3x3, stride, pad=1): 9 shifted taps -> 9 accumulated MXU matmuls
    # TODO(synk): the halo/tap gather is plain-JAX layout glue (reads a1 9x from
    # HBM); an in-kernel halo DMA over NHWC tiles would cut that traffic further.
    a1 = a1[:m1].reshape(n, h, w, p_p)
    a1p = jnp.pad(a1, ((0, 0), (1, 1), (1, 1), (0, 0)))
    taps = [jax.lax.slice(a1p, (0, kh, kw, 0),
                          (n, kh + stride * (ho - 1) + 1,
                           kw + stride * (wo - 1) + 1, p_p),
                          (1, stride, stride, 1))
            for kh in range(3) for kw in range(3)]
    taps = jnp.stack(taps, axis=0).reshape(9, m2, p_p)
    taps = jnp.pad(taps, ((0, 0), (0, mp2 - m2), (0, 0)))
    w2 = jnp.pad(params["w2"],
                 ((0, 0), (0, 0), (0, p_p - planes), (0, p_p - planes)))
    w2 = w2.reshape(9, p_p, p_p).astype(jnp.bfloat16)
    y2, ps2, pss2 = _mm_stats(taps, w2, tm2)
    sc2, sh2 = _bn_scale_shift(ps2, pss2, m2,
                               _pad1(params["g2"], p_p), _pad1(params["b2"], p_p))

    # shortcut input (strided 1x1 spatial sampling of x)
    xs_flat = x[:, ::stride, ::stride, :].reshape(m2, cin)
    has_proj = "wsc" in params

    # fused: bn2-apply + conv3 matmul (+ shortcut projection matmul) + stats
    w3 = _pad2(params["w3"], p_p, o_p).astype(jnp.bfloat16)
    if has_proj:
        xs = _pad2(xs_flat, mp2, cin_p).astype(jnp.bfloat16)
        wsc = _pad2(params["wsc"], cin_p, o_p).astype(jnp.bfloat16)
        y3, ps3, pss3, ysc, pssc, psssc = _bn_mm_stats(
            y2, sc2, sh2, w3, xs, wsc, tm2, m2)
    else:
        y3, ps3, pss3 = _bn_mm_stats(y2, sc2, sh2, w3, None, None, tm2, m2)
    sc3, sh3 = _bn_scale_shift(ps3, pss3, m2,
                               _pad1(params["g3"], o_p), _pad1(params["b3"], o_p))

    # fused: bn3 (+ bn_sc) + residual add + relu
    if has_proj:
        scsc, shsc = _bn_scale_shift(pssc, psssc, m2,
                                     _pad1(params["gsc"], o_p),
                                     _pad1(params["bsc"], o_p))
        out = _bn_add_relu(y3, sc3, sh3, (ysc, scsc, shsc), tm2)
    else:
        xid = _pad2(xs_flat, mp2, o_p)                             # identity, f32
        out = _bn_add_relu(y3, sc3, sh3, (xid,), tm2)

    out = out[:m2, :out_planes].reshape(n, ho, wo, out_planes)
    return jnp.transpose(out, (0, 3, 1, 2))                        # back to NCHW


# ----------------------------- pure-JAX reference ----------------------------

def bottleneck_reference(x, params, planes, stride):
    def conv(v, w_oihw, s=1, pad=0):
        return jax.lax.conv_general_dilated(
            v, w_oihw, (s, s), [(pad, pad)] * 2,
            dimension_numbers=("NCHW", "OIHW", "NCHW"))

    def bn(y, g, b):
        mean = jnp.mean(y, axis=(0, 2, 3), keepdims=True)
        var = jnp.mean((y - mean) ** 2, axis=(0, 2, 3), keepdims=True)
        return ((y - mean) * jax.lax.rsqrt(var + EPS)
                * g[None, :, None, None] + b[None, :, None, None])

    relu = lambda v: jnp.maximum(v, 0.0)
    w1 = params["w1"].T[:, :, None, None]
    w2 = jnp.transpose(params["w2"], (3, 2, 0, 1))
    w3 = params["w3"].T[:, :, None, None]
    out = relu(bn(conv(x, w1), params["g1"], params["b1"]))
    out = relu(bn(conv(out, w2, stride, 1), params["g2"], params["b2"]))
    out = bn(conv(out, w3), params["g3"], params["b3"])
    if "wsc" in params:
        wsc = params["wsc"].T[:, :, None, None]
        sc = bn(conv(x, wsc, stride), params["gsc"], params["bsc"])
    else:
        sc = x
    return relu(out + sc)


# ------------------------------------ main ------------------------------------

if __name__ == "__main__":
    configs = [
        # (N, in_planes, planes, stride, H, W)
        (2, 8, 4, 2, 8, 8),    # projection shortcut, stride 2
        (2, 16, 4, 1, 8, 8),   # identity shortcut
        (1, 8, 4, 1, 5, 5),    # odd spatial size -> padded row tiles + row mask
    ]
    fwd = jax.jit(bottleneck_forward, static_argnums=(2, 3))
    key = jax.random.PRNGKey(0)
    for idx, (n, in_planes, planes, stride, h, w) in enumerate(configs):
        key, k_x, k_p = jax.random.split(key, 3)
        x = jax.random.normal(k_x, (n, in_planes, h, w), jnp.float32)
        params = init_bottleneck_params(k_p, in_planes, planes, stride)

        out = jax.block_until_ready(fwd(x, params, planes, stride))

        ho = (h - 1) // stride + 1
        wo = (w - 1) // stride + 1
        assert out.shape == (n, EXPANSION * planes, ho, wo), out.shape

        ref = bottleneck_reference(x, params, planes, stride)
        max_err = float(jnp.max(jnp.abs(out - ref)))
        # bf16 MXU inputs (f32 accumulation / f32 BN) -> slightly looser tol
        if not jnp.allclose(out, ref, atol=3e-2, rtol=3e-2):
            raise AssertionError(
                f"config {idx}: Pallas output mismatch vs reference, "
                f"max_err={max_err}")
    print("KERNEL_OK")
</pallas_src>

<mosaic_0001>
module attributes {stable_mosaic.version = 11 : i64} {
  func.func @_mm_stats_kernel(%arg0: i32, %arg1: memref<1x128x128xbf16, #tpu.memory_space<vmem>>, %arg2: memref<1x128x128xbf16, #tpu.memory_space<vmem>>, %arg3: memref<128x128xf32, #tpu.memory_space<vmem>>, %arg4: memref<1x8x128xf32, #tpu.memory_space<vmem>>, %arg5: memref<1x8x128xf32, #tpu.memory_space<vmem>>) attributes {dimension_semantics = [#tpu.dimension_semantics<parallel>], iteration_bounds = array<i64: 1>, scalar_prefetch = 0 : i64, scratch_operands = 0 : i64, tpu.core_type = #tpu.core_type<tc>, window_params = [{transform_indices = @transform_0, window_bounds = array<i64: 1, 128, 128>}, {pipeline_mode = #tpu.pipeline_mode<synchronous>, transform_indices = @transform_1, window_bounds = array<i64: 1, 128, 128>}, {transform_indices = @transform_2, window_bounds = array<i64: 128, 128>}, {transform_indices = @transform_3, window_bounds = array<i64: 1, 8, 128>}, {transform_indices = @transform_4, window_bounds = array<i64: 1, 8, 128>}]} {
    %c0 = arith.constant 0 : index
    %c0_0 = arith.constant 0 : index
    %c0_1 = arith.constant 0 : index
    %0 = vector.load %arg1[%c0, %c0_0, %c0_1] : memref<1x128x128xbf16, #tpu.memory_space<vmem>>, vector<1x128x128xbf16>
    %1 = vector.shape_cast %0 : vector<1x128x128xbf16> to vector<128x128xbf16>
    %c0_2 = arith.constant 0 : index
    %c0_3 = arith.constant 0 : index
    %c0_4 = arith.constant 0 : index
    %2 = vector.load %arg2[%c0_2, %c0_3, %c0_4] : memref<1x128x128xbf16, #tpu.memory_space<vmem>>, vector<1x128x128xbf16>
    %3 = vector.shape_cast %2 : vector<1x128x128xbf16> to vector<128x128xbf16>
    %cst = arith.constant dense<0.000000e+00> : vector<128x128xf32>
    %4 = tpu.matmul %1, %3, %cst {dimension_numbers = #tpu.dot_dimension_numbers<[1], [0], [0], [1], [0, 0, 1, 1], [], []>} : vector<128x128xbf16>, vector<128x128xbf16>, vector<128x128xf32> -> vector<128x128xf32>
    %c0_5 = arith.constant 0 : index
    %c0_6 = arith.constant 0 : index
    %5 = vector.load %arg3[%c0_5, %c0_6] : memref<128x128xf32, #tpu.memory_space<vmem>>, vector<128x128xf32>
    tpu.vector_store %arg3[%c0_5, %c0_6], %4 {strides = array<i32>} : memref<128x128xf32, #tpu.memory_space<vmem>>, vector<128x128xf32>,
    %cst_7 = arith.constant dense<0.000000e+00> : vector<128xf32>
    %6 = vector.multi_reduction <add>, %4, %cst_7 [0] : vector<128x128xf32> to vector<128xf32>
    %7 = vector.shape_cast %6 : vector<128xf32> to vector<1x1x128xf32>
    %8 = vector.shape_cast %7 : vector<1x1x128xf32> to vector<1x1x128xf32>
    %9 = vector.broadcast %8 : vector<1x1x128xf32> to vector<1x8x128xf32>
    %c0_8 = arith.constant 0 : index
    %c0_9 = arith.constant 0 : index
    %c0_10 = arith.constant 0 : index
    %10 = vector.load %arg4[%c0_8, %c0_9, %c0_10] : memref<1x8x128xf32, #tpu.memory_space<vmem>>, vector<1x8x128xf32>
    tpu.vector_store %arg4[%c0_8, %c0_9, %c0_10], %9 {strides = array<i32>} : memref<1x8x128xf32, #tpu.memory_space<vmem>>, vector<1x8x128xf32>,
    %11 = arith.mulf %4, %4 : vector<128x128xf32>
    %cst_11 = arith.constant dense<0.000000e+00> : vector<128xf32>
    %12 = vector.multi_reduction <add>, %11, %cst_11 [0] : vector<128x128xf32> to vector<128xf32>
    %13 = vector.shape_cast %12 : vector<128xf32> to vector<1x1x128xf32>
    %14 = vector.shape_cast %13 : vector<1x1x128xf32> to vector<1x1x128xf32>
    %15 = vector.broadcast %14 : vector<1x1x128xf32> to vector<1x8x128xf32>
    %c0_12 = arith.constant 0 : index
    %c0_13 = arith.constant 0 : index
    %c0_14 = arith.constant 0 : index
    %16 = vector.load %arg5[%c0_12, %c0_13, %c0_14] : memref<1x8x128xf32, #tpu.memory_space<vmem>>, vector<1x8x128xf32>
    tpu.vector_store %arg5[%c0_12, %c0_13, %c0_14], %15 {strides = array<i32>} : memref<1x8x128xf32, #tpu.memory_space<vmem>>, vector<1x8x128xf32>,
    return
  }
  func.func @transform_0(%arg0: i32) -> (i32, i32, i32) {
    %c0_i32 = arith.constant 0 : i32
    %c0_i32_0 = arith.constant 0 : i32
    %c0_i32_1 = arith.constant 0 : i32
    return %c0_i32, %arg0, %c0_i32_0 : i32, i32, i32
  }
  func.func @transform_1(%arg0: i32) -> (i32, i32, i32) {
    %c0_i32 = arith.constant 0 : i32
    %c0_i32_0 = arith.constant 0 : i32
    %c0_i32_1 = arith.constant 0 : i32
    %c0_i32_2 = arith.constant 0 : i32
    return %c0_i32, %c0_i32_0, %c0_i32_1 : i32, i32, i32
  }
  func.func @transform_2(%arg0: i32) -> (i32, i32) {
    %c0_i32 = arith.constant 0 : i32
    %c0_i32_0 = arith.constant 0 : i32
    return %arg0, %c0_i32 : i32, i32
  }
  func.func @transform_3(%arg0: i32) -> (i32, i32, i32) {
    %c0_i32 = arith.constant 0 : i32
    %c0_i32_0 = arith.constant 0 : i32
    %c0_i32_1 = arith.constant 0 : i32
    return %arg0, %c0_i32, %c0_i32_0 : i32, i32, i32
  }
  func.func @transform_4(%arg0: i32) -> (i32, i32, i32) {
    %c0_i32 = arith.constant 0 : i32
    %c0_i32_0 = arith.constant 0 : i32
    %c0_i32_1 = arith.constant 0 : i32
    return %arg0, %c0_i32, %c0_i32_0 : i32, i32, i32
  }
}

module attributes {stable_mosaic.version = 11 : i64} {
  func.func @_bn_relu_kernel(%arg0: i32, %arg1: memref<128x128xf32, #tpu.memory_space<vmem>>, %arg2: memref<1x128xf32, #tpu.memory_space<vmem>>, %arg3: memref<1x128xf32, #tpu.memory_space<vmem>>, %arg4: memref<128x128xbf16, #tpu.memory_space<vmem>>) attributes {dimension_semantics = [#tpu.dimension_semantics<parallel>], iteration_bounds = array<i64: 1>, scalar_prefetch = 0 : i64, scratch_operands = 0 : i64, tpu.core_type = #tpu.core_type<tc>, window_params = [{transform_indices = @transform_0, window_bounds = array<i64: 128, 128>}, {pipeline_mode = #tpu.pipeline_mode<synchronous>, transform_indices = @transform_1, window_bounds = array<i64: 1, 128>}, {pipeline_mode = #tpu.pipeline_mode<synchronous>, transform_indices = @transform_2, window_bounds = array<i64: 1, 128>}, {transform_indices = @transform_3, window_bounds = array<i64: 128, 128>}]} {
    %c0 = arith.constant 0 : index
    %c0_0 = arith.constant 0 : index
    %0 = vector.load %arg1[%c0, %c0_0] : memref<128x128xf32, #tpu.memory_space<vmem>>, vector<128x128xf32>
    %c0_1 = arith.constant 0 : index
    %c0_2 = arith.constant 0 : index
    %1 = vector.load %arg2[%c0_1, %c0_2] : memref<1x128xf32, #tpu.memory_space<vmem>>, vector<1x128xf32>
    %2 = vector.broadcast %1 : vector<1x128xf32> to vector<128x128xf32>
    %3 = arith.mulf %0, %2 : vector<128x128xf32>
    %c0_3 = arith.constant 0 : index
    %c0_4 = arith.constant 0 : index
    %4 = vector.load %arg3[%c0_3, %c0_4] : memref<1x128xf32, #tpu.memory_space<vmem>>, vector<1x128xf32>
    %5 = vector.broadcast %4 : vector<1x128xf32> to vector<128x128xf32>
    %6 = arith.addf %3, %5 : vector<128x128xf32>
    %cst = arith.constant 0.000000e+00 : f32
    %7 = vector.broadcast %cst : f32 to vector<128x128xf32>
    %8 = arith.maximumf %6, %7 : vector<128x128xf32>
    %9 = arith.truncf %8 : vector<128x128xf32> to vector<128x128xbf16>
    %c0_5 = arith.constant 0 : index
    %c0_6 = arith.constant 0 : index
    %10 = vector.load %arg4[%c0_5, %c0_6] : memref<128x128xbf16, #tpu.memory_space<vmem>>, vector<128x128xbf16>
    tpu.vector_store %arg4[%c0_5, %c0_6], %9 {strides = array<i32>} : memref<128x128xbf16, #tpu.memory_space<vmem>>, vector<128x128xbf16>,
    return
  }
  func.func @transform_0(%arg0: i32) -> (i32, i32) {
    %c0_i32 = arith.constant 0 : i32
    %c0_i32_0 = arith.constant 0 : i32
    return %arg0, %c0_i32 : i32, i32
  }
  func.func @transform_1(%arg0: i32) -> (i32, i32) {
    %c0_i32 = arith.constant 0 : i32
    %c0_i32_0 = arith.constant 0 : i32
    %c0_i32_1 = arith.constant 0 : i32
    return %c0_i32, %c0_i32_0 : i32, i32
  }
  func.func @transform_2(%arg0: i32) -> (i32, i32) {
    %c0_i32 = arith.constant 0 : i32
    %c0_i32_0 = arith.constant 0 : i32
    %c0_i32_1 = arith.constant 0 : i32
    return %c0_i32, %c0_i32_0 : i32, i32
  }
  func.func @transform_3(%arg0: i32) -> (i32, i32) {
    %c0_i32 = arith.constant 0 : i32
    %c0_i32_0 = arith.constant 0 : i32
    return %arg0, %c0_i32 : i32, i32
  }
}

module attributes {stable_mosaic.version = 11 : i64} {
  func.func @_mm_stats_kernel(%arg0: i32, %arg1: memref<9x32x128xbf16, #tpu.memory_space<vmem>>, %arg2: memref<9x128x128xbf16, #tpu.memory_space<vmem>>, %arg3: memref<32x128xf32, #tpu.memory_space<vmem>>, %arg4: memref<1x8x128xf32, #tpu.memory_space<vmem>>, %arg5: memref<1x8x128xf32, #tpu.memory_space<vmem>>) attributes {dimension_semantics = [#tpu.dimension_semantics<parallel>], iteration_bounds = array<i64: 1>, scalar_prefetch = 0 : i64, scratch_operands = 0 : i64, tpu.core_type = #tpu.core_type<tc>, window_params = [{transform_indices = @transform_0, window_bounds = array<i64: 9, 32, 128>}, {pipeline_mode = #tpu.pipeline_mode<synchronous>, transform_indices = @transform_1, window_bounds = array<i64: 9, 128, 128>}, {transform_indices = @transform_2, window_bounds = array<i64: 32, 128>}, {transform_indices = @transform_3, window_bounds = array<i64: 1, 8, 128>}, {transform_indices = @transform_4, window_bounds = array<i64: 1, 8, 128>}]} {
    %c0 = arith.constant 0 : index
    %c0_0 = arith.constant 0 : index
    %c0_1 = arith.constant 0 : index
    %0 = vector.load %arg1[%c0, %c0_0, %c0_1] : memref<9x32x128xbf16, #tpu.memory_space<vmem>>, vector<1x32x128xbf16>
    %1 = vector.shape_cast %0 : vector<1x32x128xbf16> to vector<32x128xbf16>
    %c0_2 = arith.constant 0 : index
    %c0_3 = arith.constant 0 : index
    %c0_4 = arith.constant 0 : index
    %2 = vector.load %arg2[%c0_2, %c0_3, %c0_4] : memref<9x128x128xbf16, #tpu.memory_space<vmem>>, vector<1x128x128xbf16>
    %3 = vector.shape_cast %2 : vector<1x128x128xbf16> to vector<128x128xbf16>
    %cst = arith.constant dense<0.000000e+00> : vector<32x128xf32>
    %4 = tpu.matmul %1, %3, %cst {dimension_numbers = #tpu.dot_dimension_numbers<[1], [0], [0], [1], [0, 0, 1, 1], [], []>} : vector<32x128xbf16>, vector<128x128xbf16>, vector<32x128xf32> -> vector<32x128xf32>
    %c1 = arith.constant 1 : index
    %c0_5 = arith.constant 0 : index
    %c0_6 = arith.constant 0 : index
    %5 = vector.load %arg1[%c1, %c0_5, %c0_6] : memref<9x32x128xbf16, #tpu.memory_space<vmem>>, vector<1x32x128xbf16>
    %6 = vector.shape_cast %5 : vector<1x32x128xbf16> to vector<32x128xbf16>
    %c1_7 = arith.constant 1 : index
    %c0_8 = arith.constant 0 : index
    %c0_9 = arith.constant 0 : index
    %7 = vector.load %arg2[%c1_7, %c0_8, %c0_9] : memref<9x128x128xbf16, #tpu.memory_space<vmem>>, vector<1x128x128xbf16>
    %8 = vector.shape_cast %7 : vector<1x128x128xbf16> to vector<128x128xbf16>
    %cst_10 = arith.constant dense<0.000000e+00> : vector<32x128xf32>
    %9 = tpu.matmul %6, %8, %cst_10 {dimension_numbers = #tpu.dot_dimension_numbers<[1], [0], [0], [1], [0, 0, 1, 1], [], []>} : vector<32x128xbf16>, vector<128x128xbf16>, vector<32x128xf32> -> vector<32x128xf32>
    %10 = arith.addf %4, %9 : vector<32x128xf32>
    %c2 = arith.constant 2 : index
    %c0_11 = arith.constant 0 : index
    %c0_12 = arith.constant 0 : index
    %11 = vector.load %arg1[%c2, %c0_11, %c0_12] : memref<9x32x128xbf16, #tpu.memory_space<vmem>>, vector<1x32x128xbf16>
    %12 = vector.shape_cast %11 : vector<1x32x128xbf16> to vector<32x128xbf16>
    %c2_13 = arith.constant 2 : index
    %c0_14 = arith.constant 0 : index
    %c0_15 = arith.constant 0 : index
    %13 = vector.load %arg2[%c2_13, %c0_14, %c0_15] : memref<9x128x128xbf16, #tpu.memory_space<vmem>>, vector<1x128x128xbf16>
    %14 = vector.shape_cast %13 : vector<1x128x128xbf16> to vector<128x128xbf16>
    %cst_16 = arith.constant dense<0.000000e+00> : vector<32x128xf32>
    %15 = tpu.matmul %12, %14, %cst_16 {dimension_numbers = #tpu.dot_dimension_numbers<[1], [0], [0], [1], [0, 0, 1, 1], [], []>} : vector<32x128xbf16>, vector<128x128xbf16>, vector<32x128xf32> -> vector<32x128xf32>
    %16 = arith.addf %10, %15 : vector<32x128xf32>
    %c3 = arith.constant 3 : index
    %c0_17 = arith.constant 0 : index
    %c0_18 = arith.constant 0 : index
    %17 = vector.load %arg1[%c3, %c0_17, %c0_18] : memref<9x32x128xbf16, #tpu.memory_space<vmem>>, vector<1x32x128xbf16>
    %18 = vector.shape_cast %17 : vector<1x32x128xbf16> to vector<32x128xbf16>
    %c3_19 = arith.constant 3 : index
    %c0_20 = arith.constant 0 : index
    %c0_21 = arith.constant 0 : index
    %19 = vector.load %arg2[%c3_19, %c0_20, %c0_21] : memref<9x128x128xbf16, #tpu.memory_space<vmem>>, vector<1x128x128xbf16>
    %20 = vector.shape_cast %19 : vector<1x128x128xbf16> to vector<128x128xbf16>
    %cst_22 = arith.constant dense<0.000000e+00> : vector<32x128xf32>
    %21 = tpu.matmul %18, %20, %cst_22 {dimension_numbers = #tpu.dot_dimension_numbers<[1], [0], [0], [1], [0, 0, 1, 1], [], []>} : vector<32x128xbf16>, vector<128x128xbf16>, vector<32x128xf32> -> vector<32x128xf32>
    %22 = arith.addf %16, %21 : vector<32x128xf32>
    %c4 = arith.constant 4 : index
    %c0_23 = arith.constant 0 : index
    %c0_24 = arith.constant 0 : index
    %23 = vector.load %arg1[%c4, %c0_23, %c0_24] : memref<9x32x128xbf16, #tpu.memory_space<vmem>>, vector<1x32x128xbf16>
    %24 = vector.shape_cast %23 : vector<1x32x128xbf16> to vector<32x128xbf16>
    %c4_25 = arith.constant 4 : index
    %c0_26 = arith.constant 0 : index
    %c0_27 = arith.constant 0 : index
    %25 = vector.load %arg2[%c4_25, %c0_26, %c0_27] : memref<9x128x128xbf16, #tpu.memory_space<vmem>>, vector<1x128x128xbf16>
    %26 = vector.shape_cast %25 : vector<1x128x128xbf16> to vector<128x128xbf16>
    %cst_28 = arith.constant dense<0.000000e+00> : vector<32x128xf32>
    %27 = tpu.matmul %24, %26, %cst_28 {dimension_numbers = #tpu.dot_dimension_numbers<[1], [0], [0], [1], [0, 0, 1, 1], [], []>} : vector<32x128xbf16>, vector<128x128xbf16>, vector<32x128xf32> -> vector<32x128xf32>
    %28 = arith.addf %22, %27 : vector<32x128xf32>
    %c5 = arith.constant 5 : index
    %c0_29 = arith.constant 0 : index
    %c0_30 = arith.constant 0 : index
    %29 = vector.load %arg1[%c5, %c0_29, %c0_30] : memref<9x32x128xbf16, #tpu.memory_space<vmem>>, vector<1x32x128xbf16>
    %30 = vector.shape_cast %29 : vector<1x32x128xbf16> to vector<32x128xbf16>
    %c5_31 = arith.constant 5 : index
    %c0_32 = arith.constant 0 : index
    %c0_33 = arith.constant 0 : index
    %31 = vector.load %arg2[%c5_31, %c0_32, %c0_33] : memref<9x128x128xbf16, #tpu.memory_space<vmem>>, vector<1x128x128xbf16>
    %32 = vector.shape_cast %31 : vector<1x128x128xbf16> to vector<128x128xbf16>
    %cst_34 = arith.constant dense<0.000000e+00> : vector<32x128xf32>
    %33 = tpu.matmul %30, %32, %cst_34 {dimension_numbers = #tpu.dot_dimension_numbers<[1], [0], [0], [1], [0, 0, 1, 1], [], []>} : vector<32x128xbf16>, vector<128x128xbf16>, vector<32x128xf32> -> vector<32x128xf32>
    %34 = arith.addf %28, %33 : vector<32x128xf32>
    %c6 = arith.constant 6 : index
    %c0_35 = arith.constant 0 : index
    %c0_36 = arith.constant 0 : index
    %35 = vector.load %arg1[%c6, %c0_35, %c0_36] : memref<9x32x128xbf16, #tpu.memory_space<vmem>>, vector<1x32x128xbf16>
    %36 = vector.shape_cast %35 : vector<1x32x128xbf16> to vector<32x128xbf16>
    %c6_37 = arith.constant 6 : index
    %c0_38 = arith.constant 0 : index
    %c0_39 = arith.constant 0 : index
    %37 = vector.load %arg2[%c6_37, %c0_38, %c0_39] : memref<9x128x128xbf16, #tpu.memory_space<vmem>>, vector<1x128x128xbf16>
    %38 = vector.shape_cast %37 : vector<1x128x128xbf16> to vector<128x128xbf16>
    %cst_40 = arith.constant dense<0.000000e+00> : vector<32x128xf32>
    %39 = tpu.matmul %36, %38, %cst_40 {dimension_numbers = #tpu.dot_dimension_numbers<[1], [0], [0], [1], [0, 0, 1, 1], [], []>} : vector<32x128xbf16>, vector<128x128xbf16>, vector<32x128xf32> -> vector<32x128xf32>
    %40 = arith.addf %34, %39 : vector<32x128xf32>
    %c7 = arith.constant 7 : index
    %c0_41 = arith.constant 0 : index
    %c0_42 = arith.constant 0 : index
    %41 = vector.load %arg1[%c7, %c0_41, %c0_42] : memref<9x32x128xbf16, #tpu.memory_space<vmem>>, vector<1x32x128xbf16>
    %42 = vector.shape_cast %41 : vector<1x32x128xbf16> to vector<32x128xbf16>
    %c7_43 = arith.constant 7 : index
    %c0_44 = arith.constant 0 : index
    %c0_45 = arith.constant 0 : index
    %43 = vector.load %arg2[%c7_43, %c0_44, %c0_45] : memref<9x128x128xbf16, #tpu.memory_space<vmem>>, vector<1x128x128xbf16>
    %44 = vector.shape_cast %43 : vector<1x128x128xbf16> to vector<128x128xbf16>
    %cst_46 = arith.constant dense<0.000000e+00> : vector<32x128xf32>
    %45 = tpu.matmul %42, %44, %cst_46 {dimension_numbers = #tpu.dot_dimension_numbers<[1], [0], [0], [1], [0, 0, 1, 1], [], []>} : vector<32x128xbf16>, vector<128x128xbf16>, vector<32x128xf32> -> vector<32x128xf32>
    %46 = arith.addf %40, %45 : vector<32x128xf32>
    %c8 = arith.constant 8 : index
    %c0_47 = arith.constant 0 : index
    %c0_48 = arith.constant 0 : index
    %47 = vector.load %arg1[%c8, %c0_47, %c0_48] : memref<9x32x128xbf16, #tpu.memory_space<vmem>>, vector<1x32x128xbf16>
    %48 = vector.shape_cast %47 : vector<1x32x128xbf16> to vector<32x128xbf16>
    %c8_49 = arith.constant 8 : index
    %c0_50 = arith.constant 0 : index
    %c0_51 = arith.constant 0 : index
    %49 = vector.load %arg2[%c8_49, %c0_50, %c0_51] : memref<9x128x128xbf16, #tpu.memory_space<vmem>>, vector<1x128x128xbf16>
    %50 = vector.shape_cast %49 : vector<1x128x128xbf16> to vector<128x128xbf16>
    %cst_52 = arith.constant dense<0.000000e+00> : vector<32x128xf32>
    %51 = tpu.matmul %48, %50, %cst_52 {dimension_numbers = #tpu.dot_dimension_numbers<[1], [0], [0], [1], [0, 0, 1, 1], [], []>} : vector<32x128xbf16>, vector<128x128xbf16>, vector<32x128xf32> -> vector<32x128xf32>
    %52 = arith.addf %46, %51 : vector<32x128xf32>
    %c0_53 = arith.constant 0 : index
    %c0_54 = arith.constant 0 : index
    %53 = vector.load %arg3[%c0_53, %c0_54] : memref<32x128xf32, #tpu.memory_space<vmem>>, vector<32x128xf32>
    tpu.vector_store %arg3[%c0_53, %c0_54], %52 {strides = array<i32>} : memref<32x128xf32, #tpu.memory_space<vmem>>, vector<32x128xf32>,
    %cst_55 = arith.constant dense<0.000000e+00> : vector<128xf32>
    %54 = vector.multi_reduction <add>, %52, %cst_55 [0] : vector<32x128xf32> to vector<128xf32>
    %55 = vector.shape_cast %54 : vector<128xf32> to vector<1x1x128xf32>
    %56 = vector.shape_cast %55 : vector<1x1x128xf32> to vector<1x1x128xf32>
    %57 = vector.broadcast %56 : vector<1x1x128xf32> to vector<1x8x128xf32>
    %c0_56 = arith.constant 0 : index
    %c0_57 = arith.constant 0 : index
    %c0_58 = arith.constant 0 : index
    %58 = vector.load %arg4[%c0_56, %c0_57, %c0_58] : memref<1x8x128xf32, #tpu.memory_space<vmem>>, vector<1x8x128xf32>
    tpu.vector_store %arg4[%c0_56, %c0_57, %c0_58], %57 {strides = array<i32>} : memref<1x8x128xf32, #tpu.memory_space<vmem>>, vector<1x8x128xf32>,
    %59 = arith.mulf %52, %52 : vector<32x128xf32>
    %cst_59 = arith.constant dense<0.000000e+00> : vector<128xf32>
    %60 = vector.multi_reduction <add>, %59, %cst_59 [0] : vector<32x128xf32> to vector<128xf32>
    %61 = vector.shape_cast %60 : vector<128xf32> to vector<1x1x128xf32>
    %62 = vector.shape_cast %61 : vector<1x1x128xf32> to vector<1x1x128xf32>
    %63 = vector.broadcast %62 : vector<1x1x128xf32> to vector<1x8x128xf32>
    %c0_60 = arith.constant 0 : index
    %c0_61 = arith.constant 0 : index
    %c0_62 = arith.constant 0 : index
    %64 = vector.load %arg5[%c0_60, %c0_61, %c0_62] : memref<1x8x128xf32, #tpu.memory_space<vmem>>, vector<1x8x128xf32>
    tpu.vector_store %arg5[%c0_60, %c0_61, %c0_62], %63 {strides = array<i32>} : memref<1x8x128xf32, #tpu.memory_space<vmem>>, vector<1x8x128xf32>,
    return
  }
  func.func @transform_0(%arg0: i32) -> (i32, i32, i32) {
    %c0_i32 = arith.constant 0 : i32
    %c0_i32_0 = arith.constant 0 : i32
    %c0_i32_1 = arith.constant 0 : i32
    return %c0_i32, %arg0, %c0_i32_0 : i32, i32, i32
  }
  func.func @transform_1(%arg0: i32) -> (i32, i32, i32) {
    %c0_i32 = arith.constant 0 : i32
    %c0_i32_0 = arith.constant 0 : i32
    %c0_i32_1 = arith.constant 0 : i32
    %c0_i32_2 = arith.constant 0 : i32
    return %c0_i32, %c0_i32_0, %c0_i32_1 : i32, i32, i32
  }
  func.func @transform_2(%arg0: i32) -> (i32, i32) {
    %c0_i32 = arith.constant 0 : i32
    %c0_i32_0 = arith.constant 0 : i32
    return %arg0, %c0_i32 : i32, i32
  }
  func.func @transform_3(%arg0: i32) -> (i32, i32, i32) {
    %c0_i32 = arith.constant 0 : i32
    %c0_i32_0 = arith.constant 0 : i32
    %c0_i32_1 = arith.constant 0 : i32
    return %arg0, %c0_i32, %c0_i32_0 : i32, i32, i32
  }
  func.func @transform_4(%arg0: i32) -> (i32, i32, i32) {
    %c0_i32 = arith.constant 0 : i32
    %c0_i32_0 = arith.constant 0 : i32
    %c0_i32_1 = arith.constant 0 : i32
    return %arg0, %c0_i32, %c0_i32_0 : i32, i32, i32
  }
}

module attributes {stable_mosaic.version = 11 : i64} {
  func.func @_bn_mm_stats_kernel(%arg0: i32, %arg1: memref<32x128xf32, #tpu.memory_space<vmem>>, %arg2: memref<1x128xf32, #tpu.memory_space<vmem>>, %arg3: memref<1x128xf32, #tpu.memory_space<vmem>>, %arg4: memref<128x128xbf16, #tpu.memory_space<vmem>>, %arg5: memref<32x128xbf16, #tpu.memory_space<vmem>>, %arg6: memref<128x128xbf16, #tpu.memory_space<vmem>>, %arg7: memref<32x128xf32, #tpu.memory_space<vmem>>, %arg8: memref<1x8x128xf32, #tpu.memory_space<vmem>>, %arg9: memref<1x8x128xf32, #tpu.memory_space<vmem>>, %arg10: memref<32x128xf32, #tpu.memory_space<vmem>>, %arg11: memref<1x8x128xf32, #tpu.memory_space<vmem>>, %arg12: memref<1x8x128xf32, #tpu.memory_space<vmem>>) attributes {dimension_semantics = [#tpu.dimension_semantics<parallel>], iteration_bounds = array<i64: 1>, scalar_prefetch = 0 : i64, scratch_operands = 0 : i64, tpu.core_type = #tpu.core_type<tc>, window_params = [{transform_indices = @transform_0, window_bounds = array<i64: 32, 128>}, {pipeline_mode = #tpu.pipeline_mode<synchronous>, transform_indices = @transform_1, window_bounds = array<i64: 1, 128>}, {pipeline_mode = #tpu.pipeline_mode<synchronous>, transform_indices = @transform_2, window_bounds = array<i64: 1, 128>}, {pipeline_mode = #tpu.pipeline_mode<synchronous>, transform_indices = @transform_3, window_bounds = array<i64: 128, 128>}, {transform_indices = @transform_4, window_bounds = array<i64: 32, 128>}, {pipeline_mode = #tpu.pipeline_mode<synchronous>, transform_indices = @transform_5, window_bounds = array<i64: 128, 128>}, {transform_indices = @transform_6, window_bounds = array<i64: 32, 128>}, {transform_indices = @transform_7, window_bounds = array<i64: 1, 8, 128>}, {transform_indices = @transform_8, window_bounds = array<i64: 1, 8, 128>}, {transform_indices = @transform_9, window_bounds = array<i64: 32, 128>}, {transform_indices = @transform_10, window_bounds = array<i64: 1, 8, 128>}, {transform_indices = @transform_11, window_bounds = array<i64: 1, 8, 128>}]} {
    %c0 = arith.constant 0 : index
    %c0_0 = arith.constant 0 : index
    %0 = vector.load %arg1[%c0, %c0_0] : memref<32x128xf32, #tpu.memory_space<vmem>>, vector<32x128xf32>
    %c0_1 = arith.constant 0 : index
    %c0_2 = arith.constant 0 : index
    %1 = vector.load %arg2[%c0_1, %c0_2] : memref<1x128xf32, #tpu.memory_space<vmem>>, vector<1x128xf32>
    %2 = vector.broadcast %1 : vector<1x128xf32> to vector<32x128xf32>
    %3 = arith.mulf %0, %2 : vector<32x128xf32>
    %c0_3 = arith.constant 0 : index
    %c0_4 = arith.constant 0 : index
    %4 = vector.load %arg3[%c0_3, %c0_4] : memref<1x128xf32, #tpu.memory_space<vmem>>, vector<1x128xf32>
    %5 = vector.broadcast %4 : vector<1x128xf32> to vector<32x128xf32>
    %6 = arith.addf %3, %5 : vector<32x128xf32>
    %cst = arith.constant 0.000000e+00 : f32
    %7 = vector.broadcast %cst : f32 to vector<32x128xf32>
    %8 = arith.maximumf %6, %7 : vector<32x128xf32>
    %9 = arith.truncf %8 : vector<32x128xf32> to vector<32x128xbf16>
    %c0_5 = arith.constant 0 : index
    %c0_6 = arith.constant 0 : index
    %10 = vector.load %arg4[%c0_5, %c0_6] : memref<128x128xbf16, #tpu.memory_space<vmem>>, vector<128x128xbf16>
    %cst_7 = arith.constant dense<0.000000e+00> : vector<32x128xf32>
    %11 = tpu.matmul %9, %10, %cst_7 {dimension_numbers = #tpu.dot_dimension_numbers<[1], [0], [0], [1], [0, 0, 1, 1], [], []>} : vector<32x128xbf16>, vector<128x128xbf16>, vector<32x128xf32> -> vector<32x128xf32>
    %c0_8 = arith.constant 0 : index
    %c0_9 = arith.constant 0 : index
    %12 = vector.load %arg7[%c0_8, %c0_9] : memref<32x128xf32, #tpu.memory_space<vmem>>, vector<32x128xf32>
    tpu.vector_store %arg7[%c0_8, %c0_9], %11 {strides = array<i32>} : memref<32x128xf32, #tpu.memory_space<vmem>>, vector<32x128xf32>,
    %cst_10 = arith.constant dense<0.000000e+00> : vector<128xf32>
    %13 = vector.multi_reduction <add>, %11, %cst_10 [0] : vector<32x128xf32> to vector<128xf32>
    %14 = vector.shape_cast %13 : vector<128xf32> to vector<1x1x128xf32>
    %15 = vector.shape_cast %14 : vector<1x1x128xf32> to vector<1x1x128xf32>
    %16 = vector.broadcast %15 : vector<1x1x128xf32> to vector<1x8x128xf32>
    %c0_11 = arith.constant 0 : index
    %c0_12 = arith.constant 0 : index
    %c0_13 = arith.constant 0 : index
    %17 = vector.load %arg8[%c0_11, %c0_12, %c0_13] : memref<1x8x128xf32, #tpu.memory_space<vmem>>, vector<1x8x128xf32>
    tpu.vector_store %arg8[%c0_11, %c0_12, %c0_13], %16 {strides = array<i32>} : memref<1x8x128xf32, #tpu.memory_space<vmem>>, vector<1x8x128xf32>,
    %18 = arith.mulf %11, %11 : vector<32x128xf32>
    %cst_14 = arith.constant dense<0.000000e+00> : vector<128xf32>
    %19 = vector.multi_reduction <add>, %18, %cst_14 [0] : vector<32x128xf32> to vector<128xf32>
    %20 = vector.shape_cast %19 : vector<128xf32> to vector<1x1x128xf32>
    %21 = vector.shape_cast %20 : vector<1x1x128xf32> to vector<1x1x128xf32>
    %22 = vector.broadcast %21 : vector<1x1x128xf32> to vector<1x8x128xf32>
    %c0_15 = arith.constant 0 : index
    %c0_16 = arith.constant 0 : index
    %c0_17 = arith.constant 0 : index
    %23 = vector.load %arg9[%c0_15, %c0_16, %c0_17] : memref<1x8x128xf32, #tpu.memory_space<vmem>>, vector<1x8x128xf32>
    tpu.vector_store %arg9[%c0_15, %c0_16, %c0_17], %22 {strides = array<i32>} : memref<1x8x128xf32, #tpu.memory_space<vmem>>, vector<1x8x128xf32>,
    %c0_18 = arith.constant 0 : index
    %c0_19 = arith.constant 0 : index
    %24 = vector.load %arg5[%c0_18, %c0_19] : memref<32x128xbf16, #tpu.memory_space<vmem>>, vector<32x128xbf16>
    %c0_20 = arith.constant 0 : index
    %c0_21 = arith.constant 0 : index
    %25 = vector.load %arg6[%c0_20, %c0_21] : memref<128x128xbf16, #tpu.memory_space<vmem>>, vector<128x128xbf16>
    %cst_22 = arith.constant dense<0.000000e+00> : vector<32x128xf32>
    %26 = tpu.matmul %24, %25, %cst_22 {dimension_numbers = #tpu.dot_dimension_numbers<[1], [0], [0], [1], [0, 0, 1, 1], [], []>} : vector<32x128xbf16>, vector<128x128xbf16>, vector<32x128xf32> -> vector<32x128xf32>
    %c0_23 = arith.constant 0 : index
    %c0_24 = arith.constant 0 : index
    %27 = vector.load %arg10[%c0_23, %c0_24] : memref<32x128xf32, #tpu.memory_space<vmem>>, vector<32x128xf32>
    tpu.vector_store %arg10[%c0_23, %c0_24], %26 {strides = array<i32>} : memref<32x128xf32, #tpu.memory_space<vmem>>, vector<32x128xf32>,
    %cst_25 = arith.constant dense<0.000000e+00> : vector<128xf32>
    %28 = vector.multi_reduction <add>, %26, %cst_25 [0] : vector<32x128xf32> to vector<128xf32>
    %29 = vector.shape_cast %28 : vector<128xf32> to vector<1x1x128xf32>
    %30 = vector.shape_cast %29 : vector<1x1x128xf32> to vector<1x1x128xf32>
    %31 = vector.broadcast %30 : vector<1x1x128xf32> to vector<1x8x128xf32>
    %c0_26 = arith.constant 0 : index
    %c0_27 = arith.constant 0 : index
    %c0_28 = arith.constant 0 : index
    %32 = vector.load %arg11[%c0_26, %c0_27, %c0_28] : memref<1x8x128xf32, #tpu.memory_space<vmem>>, vector<1x8x128xf32>
    tpu.vector_store %arg11[%c0_26, %c0_27, %c0_28], %31 {strides = array<i32>} : memref<1x8x128xf32, #tpu.memory_space<vmem>>, vector<1x8x128xf32>,
    %33 = arith.mulf %26, %26 : vector<32x128xf32>
    %cst_29 = arith.constant dense<0.000000e+00> : vector<128xf32>
    %34 = vector.multi_reduction <add>, %33, %cst_29 [0] : vector<32x128xf32> to vector<128xf32>
    %35 = vector.shape_cast %34 : vector<128xf32> to vector<1x1x128xf32>
    %36 = vector.shape_cast %35 : vector<1x1x128xf32> to vector<1x1x128xf32>
    %37 = vector.broadcast %36 : vector<1x1x128xf32> to vector<1x8x128xf32>
    %c0_30 = arith.constant 0 : index
    %c0_31 = arith.constant 0 : index
    %c0_32 = arith.constant 0 : index
    %38 = vector.load %arg12[%c0_30, %c0_31, %c0_32] : memref<1x8x128xf32, #tpu.memory_space<vmem>>, vector<1x8x128xf32>
    tpu.vector_store %arg12[%c0_30, %c0_31, %c0_32], %37 {strides = array<i32>} : memref<1x8x128xf32, #tpu.memory_space<vmem>>, vector<1x8x128xf32>,
    return
  }
  func.func @transform_0(%arg0: i32) -> (i32, i32) {
    %c0_i32 = arith.constant 0 : i32
    %c0_i32_0 = arith.constant 0 : i32
    return %arg0, %c0_i32 : i32, i32
  }
  func.func @transform_1(%arg0: i32) -> (i32, i32) {
    %c0_i32 = arith.constant 0 : i32
    %c0_i32_0 = arith.constant 0 : i32
    %c0_i32_1 = arith.constant 0 : i32
    return %c0_i32, %c0_i32_0 : i32, i32
  }
  func.func @transform_2(%arg0: i32) -> (i32, i32) {
    %c0_i32 = arith.constant 0 : i32
    %c0_i32_0 = arith.constant 0 : i32
    %c0_i32_1 = arith.constant 0 : i32
    return %c0_i32, %c0_i32_0 : i32, i32
  }
  func.func @transform_3(%arg0: i32) -> (i32, i32) {
    %c0_i32 = arith.constant 0 : i32
    %c0_i32_0 = arith.constant 0 : i32
    %c0_i32_1 = arith.constant 0 : i32
    return %c0_i32, %c0_i32_0 : i32, i32
  }
  func.func @transform_4(%arg0: i32) -> (i32, i32) {
    %c0_i32 = arith.constant 0 : i32
    %c0_i32_0 = arith.constant 0 : i32
    return %arg0, %c0_i32 : i32, i32
  }
  func.func @transform_5(%arg0: i32) -> (i32, i32) {
    %c0_i32 = arith.constant 0 : i32
    %c0_i32_0 = arith.constant 0 : i32
    %c0_i32_1 = arith.constant 0 : i32
    return %c0_i32, %c0_i32_0 : i32, i32
  }
  func.func @transform_6(%arg0: i32) -> (i32, i32) {
    %c0_i32 = arith.constant 0 : i32
    %c0_i32_0 = arith.constant 0 : i32
    return %arg0, %c0_i32 : i32, i32
  }
  func.func @transform_7(%arg0: i32) -> (i32, i32, i32) {
    %c0_i32 = arith.constant 0 : i32
    %c0_i32_0 = arith.constant 0 : i32
    %c0_i32_1 = arith.constant 0 : i32
    return %arg0, %c0_i32, %c0_i32_0 : i32, i32, i32
  }
  func.func @transform_8(%arg0: i32) -> (i32, i32, i32) {
    %c0_i32 = arith.constant 0 : i32
    %c0_i32_0 = arith.constant 0 : i32
    %c0_i32_1 = arith.constant 0 : i32
    return %arg0, %c0_i32, %c0_i32_0 : i32, i32, i32
  }
  func.func @transform_9(%arg0: i32) -> (i32, i32) {
    %c0_i32 = arith.constant 0 : i32
    %c0_i32_0 = arith.constant 0 : i32
    return %arg0, %c0_i32 : i32, i32
  }
  func.func @transform_10(%arg0: i32) -> (i32, i32, i32) {
    %c0_i32 = arith.constant 0 : i32
    %c0_i32_0 = arith.constant 0 : i32
    %c0_i32_1 = arith.constant 0 : i32
    return %arg0, %c0_i32, %c0_i32_0 : i32, i32, i32
  }
  func.func @transform_11(%arg0: i32) -> (i32, i32, i32) {
    %c0_i32 = arith.constant 0 : i32
    %c0_i32_0 = arith.constant 0 : i32
    %c0_i32_1 = arith.constant 0 : i32
    return %arg0, %c0_i32, %c0_i32_0 : i32, i32, i32
  }
}

module attributes {stable_mosaic.version = 11 : i64} {
  func.func @_bn_add_relu_kernel(%arg0: i32, %arg1: memref<32x128xf32, #tpu.memory_space<vmem>>, %arg2: memref<1x128xf32, #tpu.memory_space<vmem>>, %arg3: memref<1x128xf32, #tpu.memory_space<vmem>>, %arg4: memref<32x128xf32, #tpu.memory_space<vmem>>, %arg5: memref<1x128xf32, #tpu.memory_space<vmem>>, %arg6: memref<1x128xf32, #tpu.memory_space<vmem>>, %arg7: memref<32x128xf32, #tpu.memory_space<vmem>>) attributes {dimension_semantics = [#tpu.dimension_semantics<parallel>], iteration_bounds = array<i64: 1>, scalar_prefetch = 0 : i64, scratch_operands = 0 : i64, tpu.core_type = #tpu.core_type<tc>, window_params = [{transform_indices = @transform_0, window_bounds = array<i64: 32, 128>}, {pipeline_mode = #tpu.pipeline_mode<synchronous>, transform_indices = @transform_1, window_bounds = array<i64: 1, 128>}, {pipeline_mode = #tpu.pipeline_mode<synchronous>, transform_indices = @transform_2, window_bounds = array<i64: 1, 128>}, {transform_indices = @transform_3, window_bounds = array<i64: 32, 128>}, {pipeline_mode = #tpu.pipeline_mode<synchronous>, transform_indices = @transform_4, window_bounds = array<i64: 1, 128>}, {pipeline_mode = #tpu.pipeline_mode<synchronous>, transform_indices = @transform_5, window_bounds = array<i64: 1, 128>}, {transform_indices = @transform_6, window_bounds = array<i64: 32, 128>}]} {
    %c0 = arith.constant 0 : index
    %c0_0 = arith.constant 0 : index
    %0 = vector.load %arg4[%c0, %c0_0] : memref<32x128xf32, #tpu.memory_space<vmem>>, vector<32x128xf32>
    %c0_1 = arith.constant 0 : index
    %c0_2 = arith.constant 0 : index
    %1 = vector.load %arg5[%c0_1, %c0_2] : memref<1x128xf32, #tpu.memory_space<vmem>>, vector<1x128xf32>
    %2 = vector.broadcast %1 : vector<1x128xf32> to vector<32x128xf32>
    %3 = arith.mulf %0, %2 : vector<32x128xf32>
    %c0_3 = arith.constant 0 : index
    %c0_4 = arith.constant 0 : index
    %4 = vector.load %arg6[%c0_3, %c0_4] : memref<1x128xf32, #tpu.memory_space<vmem>>, vector<1x128xf32>
    %5 = vector.broadcast %4 : vector<1x128xf32> to vector<32x128xf32>
    %6 = arith.addf %3, %5 : vector<32x128xf32>
    %c0_5 = arith.constant 0 : index
    %c0_6 = arith.constant 0 : index
    %7 = vector.load %arg1[%c0_5, %c0_6] : memref<32x128xf32, #tpu.memory_space<vmem>>, vector<32x128xf32>
    %c0_7 = arith.constant 0 : index
    %c0_8 = arith.constant 0 : index
    %8 = vector.load %arg2[%c0_7, %c0_8] : memref<1x128xf32, #tpu.memory_space<vmem>>, vector<1x128xf32>
    %9 = vector.broadcast %8 : vector<1x128xf32> to vector<32x128xf32>
    %10 = arith.mulf %7, %9 : vector<32x128xf32>
    %c0_9 = arith.constant 0 : index
    %c0_10 = arith.constant 0 : index
    %11 = vector.load %arg3[%c0_9, %c0_10] : memref<1x128xf32, #tpu.memory_space<vmem>>, vector<1x128xf32>
    %12 = vector.broadcast %11 : vector<1x128xf32> to vector<32x128xf32>
    %13 = arith.addf %10, %12 : vector<32x128xf32>
    %14 = arith.addf %13, %6 : vector<32x128xf32>
    %cst = arith.constant 0.000000e+00 : f32
    %15 = vector.broadcast %cst : f32 to vector<32x128xf32>
    %16 = arith.maximumf %14, %15 : vector<32x128xf32>
    %c0_11 = arith.constant 0 : index
    %c0_12 = arith.constant 0 : index
    %17 = vector.load %arg7[%c0_11, %c0_12] : memref<32x128xf32, #tpu.memory_space<vmem>>, vector<32x128xf32>
    tpu.vector_store %arg7[%c0_11, %c0_12], %16 {strides = array<i32>} : memref<32x128xf32, #tpu.memory_space<vmem>>, vector<32x128xf32>,
    return
  }
  func.func @transform_0(%arg0: i32) -> (i32, i32) {
    %c0_i32 = arith.constant 0 : i32
    %c0_i32_0 = arith.constant 0 : i32
    return %arg0, %c0_i32 : i32, i32
  }
  func.func @transform_1(%arg0: i32) -> (i32, i32) {
    %c0_i32 = arith.constant 0 : i32
    %c0_i32_0 = arith.constant 0 : i32
    %c0_i32_1 = arith.constant 0 : i32
    return %c0_i32, %c0_i32_0 : i32, i32
  }
  func.func @transform_2(%arg0: i32) -> (i32, i32) {
    %c0_i32 = arith.constant 0 : i32
    %c0_i32_0 = arith.constant 0 : i32
    %c0_i32_1 = arith.constant 0 : i32
    return %c0_i32, %c0_i32_0 : i32, i32
  }
  func.func @transform_3(%arg0: i32) -> (i32, i32) {
    %c0_i32 = arith.constant 0 : i32
    %c0_i32_0 = arith.constant 0 : i32
    return %arg0, %c0_i32 : i32, i32
  }
  func.func @transform_4(%arg0: i32) -> (i32, i32) {
    %c0_i32 = arith.constant 0 : i32
    %c0_i32_0 = arith.constant 0 : i32
    %c0_i32_1 = arith.constant 0 : i32
    return %c0_i32, %c0_i32_0 : i32, i32
  }
  func.func @transform_5(%arg0: i32) -> (i32, i32) {
    %c0_i32 = arith.constant 0 : i32
    %c0_i32_0 = arith.constant 0 : i32
    %c0_i32_1 = arith.constant 0 : i32
    return %c0_i32, %c0_i32_0 : i32, i32
  }
  func.func @transform_6(%arg0: i32) -> (i32, i32) {
    %c0_i32 = arith.constant 0 : i32
    %c0_i32_0 = arith.constant 0 : i32
    return %arg0, %c0_i32 : i32, i32
  }
}

</mosaic_0001>

<llo_original>
// kernel: bottleneck_forward.6
$region0: #{bottleneck_forward.6}
  #allocation0 [shape = 'u32[]', space=smem, size = 0x4, offset = 0x4, fixed_abs, tag = 'smem constant byte address 0x4 - core index']
  #allocation1 [shape = 'u32[144,128]{1,0:T(1,128)}', space=vmem, size = 0x12000, scoped, tag = 'internal scratch']
  %s0 = inlined_call_operand.vmem [shape: f32[128,128], index: 0, kind: input, shape index: {}]
  %s1 = inlined_call_operand.vmem [shape: f32[1,128], index: 1, kind: input, shape index: {}]
  %s2 = inlined_call_operand.vmem [shape: f32[1,128], index: 2, kind: input, shape index: {}]
  %s3 = inlined_call_operand.vmem [shape: bf16[128,128], index: 3, kind: output, shape index: {}]
  %s4 = sld [smem:[#allocation0]]
  $region22: #{bottleneck_forward.6} parent=0
    _
  %s6 = ssub.s32 1, %s4
  %s7 = scalar_select 0, %s6, %s4
  // Predicated region
  $region2: #{bottleneck_forward.6} parent=0 // pred_check
    _
  $region3: #{bottleneck_forward.6} parent=0 // pred_check_branch
    %9 = sbr.rel (0) target = $region5
  $region4: #{bottleneck_forward.6} parent=0 // pred_region
    _
  $region5: #{bottleneck_forward.6} parent=0 // pred_fallthru
    _
  // Predicated region
  $region6: #{bottleneck_forward.6} parent=0 // pred_check
    _
  $region7: #{bottleneck_forward.6} parent=0 // pred_check_branch
    %11 = sbr.rel (0) target = $region9
  $region8: #{bottleneck_forward.6} parent=0 // pred_region
    _
  $region9: #{bottleneck_forward.6} parent=0 // pred_fallthru
    _
  // Predicated region
  $region10: #{bottleneck_forward.6} parent=0 // pred_check
    _
  $region11: #{bottleneck_forward.6} parent=0 // pred_check_branch
    %13 = sbr.rel (0) target = $region13
  $region12: #{bottleneck_forward.6} parent=0 // pred_region
    _
  $region13: #{bottleneck_forward.6} parent=0 // pred_fallthru
    _
  %v14 = vld [vmem:[%s0] sm:$0xff]
  %v15 = vld [vmem:[%s0 + $0x8] sm:$0xff]
  %v16 = vld [vmem:[%s0 + $0x10] sm:$0xff]
  %v17 = vld [vmem:[%s0 + $0x18] sm:$0xff]
  %v18 = vld [vmem:[%s0 + $0x20] sm:$0xff]
  %v19 = vld [vmem:[%s0 + $0x28] sm:$0xff]
  %v20 = vld [vmem:[%s0 + $0x30] sm:$0xff]
  %v21 = vld [vmem:[%s0 + $0x38] sm:$0xff]
  %v22 = vld [vmem:[%s0 + $0x40] sm:$0xff]
  %v23 = vld [vmem:[%s0 + $0x48] sm:$0xff]
  %v24 = vld [vmem:[%s0 + $0x50] sm:$0xff]
  %v25 = vld [vmem:[%s0 + $0x58] sm:$0xff]
  %v26 = vld [vmem:[%s0 + $0x60] sm:$0xff]
  %v27 = vld [vmem:[%s0 + $0x68] sm:$0xff]
  %v28 = vld [vmem:[%s0 + $0x70] sm:$0xff]
  %v29 = vld [vmem:[%s0 + $0x78] sm:$0xff]
  %v30 = vld [vmem:[%s1] sm:$0x1]
  %v32 = vlaneseq
  %v33 = vshrl.u32 %v32, 7
  %v34 = vsub.s32 0, %v33
  %v35 = vrot.slane %v30, %v34
  %v37 = vmul.f32 %v14, %v35
  %v38 = vmul.f32 %v15, %v35
  %v39 = vmul.f32 %v16, %v35
  %v40 = vmul.f32 %v17, %v35
  %v41 = vmul.f32 %v18, %v35
  %v42 = vmul.f32 %v19, %v35
  %v43 = vmul.f32 %v20, %v35
  %v44 = vmul.f32 %v21, %v35
  %v45 = vmul.f32 %v22, %v35
  %v46 = vmul.f32 %v23, %v35
  %v47 = vmul.f32 %v24, %v35
  %v48 = vmul.f32 %v25, %v35
  %v49 = vmul.f32 %v26, %v35
  %v50 = vmul.f32 %v27, %v35
  %v51 = vmul.f32 %v28, %v35
  %v52 = vmul.f32 %v29, %v35
  %v53 = vld [vmem:[%s2] sm:$0x1]
  %v55 = vlaneseq
  %v56 = vshrl.u32 %v55, 7
  %v57 = vsub.s32 0, %v56
  %v58 = vrot.slane %v53, %v57
  %v60 = vadd.f32 %v37, %v58
  %v61 = vadd.f32 %v38, %v58
  %v62 = vadd.f32 %v39, %v58
  %v63 = vadd.f32 %v40, %v58
  %v64 = vadd.f32 %v41, %v58
  %v65 = vadd.f32 %v42, %v58
  %v66 = vadd.f32 %v43, %v58
  %v67 = vadd.f32 %v44, %v58
  %v68 = vadd.f32 %v45, %v58
  %v69 = vadd.f32 %v46, %v58
  %v70 = vadd.f32 %v47, %v58
  %v71 = vadd.f32 %v48, %v58
  %v72 = vadd.f32 %v49, %v58
  %v73 = vadd.f32 %v50, %v58
  %v74 = vadd.f32 %v51, %v58
  %v75 = vadd.f32 %v52, %v58
  %v76 = vmax.f32 %v60, 0.0
  %v77 = vmax.f32 %v61, 0.0
  %v78 = vmax.f32 %v62, 0.0
  %v79 = vmax.f32 %v63, 0.0
  %v80 = vmax.f32 %v64, 0.0
  %v81 = vmax.f32 %v65, 0.0
  %v82 = vmax.f32 %v66, 0.0
  %v83 = vmax.f32 %v67, 0.0
  %v84 = vmax.f32 %v68, 0.0
  %v85 = vmax.f32 %v69, 0.0
  %v86 = vmax.f32 %v70, 0.0
  %v87 = vmax.f32 %v71, 0.0
  %v88 = vmax.f32 %v72, 0.0
  %v89 = vmax.f32 %v73, 0.0
  %v90 = vmax.f32 %v74, 0.0
  %v91 = vmax.f32 %v75, 0.0
  %v92 = vpack.c.bf16 %v77, %v76
  %v93 = vpack.c.bf16 %v79, %v78
  %v94 = vpack.c.bf16 %v81, %v80
  %v95 = vpack.c.bf16 %v83, %v82
  %v96 = vpack.c.bf16 %v85, %v84
  %v97 = vpack.c.bf16 %v87, %v86
  %v98 = vpack.c.bf16 %v89, %v88
  %v99 = vpack.c.bf16 %v91, %v90
  %v108 = vunpack.c.l.b16 %v92
  %v109 = vunpack.c.h.b16 %v92
  %v110 = vunpack.c.l.b16 %v93
  %v111 = vunpack.c.h.b16 %v93
  %v112 = vunpack.c.l.b16 %v94
  %v113 = vunpack.c.h.b16 %v94
  %v114 = vunpack.c.l.b16 %v95
  %v115 = vunpack.c.h.b16 %v95
  %v116 = vunpack.c.l.b16 %v96
  %v117 = vunpack.c.h.b16 %v96
  %v118 = vunpack.c.l.b16 %v97
  %v119 = vunpack.c.h.b16 %v97
  %v120 = vunpack.c.l.b16 %v98
  %v121 = vunpack.c.h.b16 %v98
  %v122 = vunpack.c.l.b16 %v99
  %v123 = vunpack.c.h.b16 %v99
  %v124 = vpack.c.b16 %v108, %v108
  %v125 = vpack.c.b16 %v109, %v109
  %v126 = vpack.c.b16 %v110, %v110
  %v127 = vpack.c.b16 %v111, %v111
  %v128 = vpack.c.b16 %v112, %v112
  %v129 = vpack.c.b16 %v113, %v113
  %v130 = vpack.c.b16 %v114, %v114
  %v131 = vpack.c.b16 %v115, %v115
  %v132 = vpack.c.b16 %v116, %v116
  %v133 = vpack.c.b16 %v117, %v117
  %v134 = vpack.c.b16 %v118, %v118
  %v135 = vpack.c.b16 %v119, %v119
  %v136 = vpack.c.b16 %v120, %v120
  %v137 = vpack.c.b16 %v121, %v121
  %v138 = vpack.c.b16 %v122, %v122
  %v139 = vpack.c.b16 %v123, %v123
  %156 = vst [vmem:[%s3] sm:$0xf] %v124
  %157 = vst [vmem:[%s3 + $0x4] sm:$0xf] %v125
  %158 = vst [vmem:[%s3 + $0x8] sm:$0xf] %v126
  %159 = vst [vmem:[%s3 + $0xc] sm:$0xf] %v127
  %160 = vst [vmem:[%s3 + $0x10] sm:$0xf] %v128
  %161 = vst [vmem:[%s3 + $0x14] sm:$0xf] %v129
  %162 = vst [vmem:[%s3 + $0x18] sm:$0xf] %v130
  %163 = vst [vmem:[%s3 + $0x1c] sm:$0xf] %v131
  %164 = vst [vmem:[%s3 + $0x20] sm:$0xf] %v132
  %165 = vst [vmem:[%s3 + $0x24] sm:$0xf] %v133
  %166 = vst [vmem:[%s3 + $0x28] sm:$0xf] %v134
  %167 = vst [vmem:[%s3 + $0x2c] sm:$0xf] %v135
  %168 = vst [vmem:[%s3 + $0x30] sm:$0xf] %v136
  %169 = vst [vmem:[%s3 + $0x34] sm:$0xf] %v137
  %170 = vst [vmem:[%s3 + $0x38] sm:$0xf] %v138
  %171 = vst [vmem:[%s3 + $0x3c] sm:$0xf] %v139
  // Predicated region
  $region14: #{bottleneck_forward.6} parent=0 // pred_check
    _
  $region15: #{bottleneck_forward.6} parent=0 // pred_check_branch
    %173 = sbr.rel (0) target = $region17
  $region16: #{bottleneck_forward.6} parent=0 // pred_region
    _
  $region17: #{bottleneck_forward.6} parent=0 // pred_fallthru
    _
  // Predicated region
  $region18: #{bottleneck_forward.6} parent=0 // pred_check
    _
  $region19: #{bottleneck_forward.6} parent=0 // pred_check_branch
    %175 = sbr.rel (0) target = $region21
  $region20: #{bottleneck_forward.6} parent=0 // pred_region
    _
  $region21: #{bottleneck_forward.6} parent=0 // pred_fallthru
    _

// kernel: bottleneck_forward.5
$region0: #{bottleneck_forward.5}
  #allocation0 [shape = 'u32[]', space=smem, size = 0x4, offset = 0x4, fixed_abs, tag = 'smem constant byte address 0x4 - core index']
  #allocation1 [shape = 'u32[144,128]{1,0:T(1,128)}', space=vmem, size = 0x12000, scoped, tag = 'internal scratch']
  %s0 = inlined_call_operand.vmem [shape: bf16[1,128,128], index: 0, kind: input, shape index: {}]
  %s1 = inlined_call_operand.vmem [shape: bf16[1,128,128], index: 1, kind: input, shape index: {}]
  %s2 = inlined_call_operand.vmem [shape: f32[128,128], index: 2, kind: output, shape index: {0}]
  %s3 = inlined_call_operand.vmem [shape: f32[1,8,128], index: 3, kind: output, shape index: {1}]
  %s4 = inlined_call_operand.vmem [shape: f32[1,8,128], index: 4, kind: output, shape index: {2}]
  %5 = xla_tuple %s2, %s3, %s4
  %s6 = sld [smem:[#allocation0]]
  $region34: #{bottleneck_forward.5} parent=0
    _
  %s8 = ssub.s32 1, %s6
  %s9 = scalar_select 0, %s8, %s6
  // Predicated region
  $region2: #{bottleneck_forward.5} parent=0 // pred_check
    _
  $region3: #{bottleneck_forward.5} parent=0 // pred_check_branch
    %11 = sbr.rel (0) target = $region5
  $region4: #{bottleneck_forward.5} parent=0 // pred_region
    _
  $region5: #{bottleneck_forward.5} parent=0 // pred_fallthru
    _
  // Predicated region
  $region6: #{bottleneck_forward.5} parent=0 // pred_check
    _
  $region7: #{bottleneck_forward.5} parent=0 // pred_check_branch
    %13 = sbr.rel (0) target = $region9
  $region8: #{bottleneck_forward.5} parent=0 // pred_region
    _
  $region9: #{bottleneck_forward.5} parent=0 // pred_fallthru
    _
  %v15 = vld [vmem:[%s0] sm:$0xf]
  %v16 = vld [vmem:[%s0 + $0x4] sm:$0xf]
  %v17 = vld [vmem:[%s0 + $0x8] sm:$0xf]
  %v18 = vld [vmem:[%s0 + $0xc] sm:$0xf]
  %v19 = vld [vmem:[%s0 + $0x10] sm:$0xf]
  %v20 = vld [vmem:[%s0 + $0x14] sm:$0xf]
  %v21 = vld [vmem:[%s0 + $0x18] sm:$0xf]
  %v22 = vld [vmem:[%s0 + $0x1c] sm:$0xf]
  %v23 = vld [vmem:[%s0 + $0x20] sm:$0xf]
  %v24 = vld [vmem:[%s0 + $0x24] sm:$0xf]
  %v25 = vld [vmem:[%s0 + $0x28] sm:$0xf]
  %v26 = vld [vmem:[%s0 + $0x2c] sm:$0xf]
  %v27 = vld [vmem:[%s0 + $0x30] sm:$0xf]
  %v28 = vld [vmem:[%s0 + $0x34] sm:$0xf]
  %v29 = vld [vmem:[%s0 + $0x38] sm:$0xf]
  %v30 = vld [vmem:[%s0 + $0x3c] sm:$0xf]
  %v31 = vld [vmem:[%s1] sm:$0xf]
  %v32 = vld [vmem:[%s1 + $0x4] sm:$0xf]
  %v33 = vld [vmem:[%s1 + $0x8] sm:$0xf]
  %v34 = vld [vmem:[%s1 + $0xc] sm:$0xf]
  %v35 = vld [vmem:[%s1 + $0x10] sm:$0xf]
  %v36 = vld [vmem:[%s1 + $0x14] sm:$0xf]
  %v37 = vld [vmem:[%s1 + $0x18] sm:$0xf]
  %v38 = vld [vmem:[%s1 + $0x1c] sm:$0xf]
  %v39 = vld [vmem:[%s1 + $0x20] sm:$0xf]
  %v40 = vld [vmem:[%s1 + $0x24] sm:$0xf]
  %v41 = vld [vmem:[%s1 + $0x28] sm:$0xf]
  %v42 = vld [vmem:[%s1 + $0x2c] sm:$0xf]
  %v43 = vld [vmem:[%s1 + $0x30] sm:$0xf]
  %v44 = vld [vmem:[%s1 + $0x34] sm:$0xf]
  %v45 = vld [vmem:[%s1 + $0x38] sm:$0xf]
  %v46 = vld [vmem:[%s1 + $0x3c] sm:$0xf]
  %v63 = vunpack.c.l.b16 %v15
  %v64 = vunpack.c.l.b16 %v16
  %v65 = vunpack.c.l.b16 %v17
  %v66 = vunpack.c.l.b16 %v18
  %v67 = vunpack.c.l.b16 %v19
  %v68 = vunpack.c.l.b16 %v20
  %v69 = vunpack.c.l.b16 %v21
  %v70 = vunpack.c.l.b16 %v22
  %v71 = vunpack.c.l.b16 %v23
  %v72 = vunpack.c.l.b16 %v24
  %v73 = vunpack.c.l.b16 %v25
  %v74 = vunpack.c.l.b16 %v26
  %v75 = vunpack.c.l.b16 %v27
  %v76 = vunpack.c.l.b16 %v28
  %v77 = vunpack.c.l.b16 %v29
  %v78 = vunpack.c.l.b16 %v30
  %v79 = vpack.c.b16 %v64, %v63
  %v80 = vpack.c.b16 %v66, %v65
  %v81 = vpack.c.b16 %v68, %v67
  %v82 = vpack.c.b16 %v70, %v69
  %v83 = vpack.c.b16 %v72, %v71
  %v84 = vpack.c.b16 %v74, %v73
  %v85 = vpack.c.b16 %v76, %v75
  %v86 = vpack.c.b16 %v78, %v77
  %v111 = vunpack.c.l.b16 %v31
  %v112 = vunpack.c.l.b16 %v32
  %v113 = vunpack.c.l.b16 %v33
  %v114 = vunpack.c.l.b16 %v34
  %v115 = vunpack.c.l.b16 %v35
  %v116 = vunpack.c.l.b16 %v36
  %v117 = vunpack.c.l.b16 %v37
  %v118 = vunpack.c.l.b16 %v38
  %v119 = vunpack.c.l.b16 %v39
  %v120 = vunpack.c.l.b16 %v40
  %v121 = vunpack.c.l.b16 %v41
  %v122 = vunpack.c.l.b16 %v42
  %v123 = vunpack.c.l.b16 %v43
  %v124 = vunpack.c.l.b16 %v44
  %v125 = vunpack.c.l.b16 %v45
  %v126 = vunpack.c.l.b16 %v46
  %v127 = vpack.c.b16 %v112, %v111
  %v128 = vpack.c.b16 %v114, %v113
  %v129 = vpack.c.b16 %v116, %v115
  %v130 = vpack.c.b16 %v118, %v117
  %v131 = vpack.c.b16 %v120, %v119
  %v132 = vpack.c.b16 %v122, %v121
  %v133 = vpack.c.b16 %v124, %v123
  %v134 = vpack.c.b16 %v126, %v125
  %143 = vmatprep.subr.bf16.mxu0 0
  %144 = vmatpush1.bf16.msra.mxu0 %v127
  %145 = vmatprep.subr.bf16.mxu0 0
  %146 = vmatpush1.bf16.msra.mxu0 %v128
  %147 = vmatprep.subr.bf16.mxu0 0
  %148 = vmatpush1.bf16.msra.mxu0 %v129
  %149 = vmatprep.subr.bf16.mxu0 0
  %150 = vmatpush1.bf16.msra.mxu0 %v130
  %151 = vmatprep.subr.bf16.mxu0 0
  %152 = vmatpush1.bf16.msra.mxu0 %v131
  %153 = vmatprep.subr.bf16.mxu0 0
  %154 = vmatpush1.bf16.msra.mxu0 %v132
  %155 = vmatprep.subr.bf16.mxu0 0
  %156 = vmatpush1.bf16.msra.mxu0 %v133
  %157 = vmatprep.subr.bf16.mxu0 0
  %158 = vmatpush1.bf16.msra.mxu0 %v134
  %159 = vmatprep.subr.bf16.mxu0 0
  %160 = vmatpush1.bf16.msra.mxu0 0
  %161 = vmatprep.subr.bf16.mxu0 0
  %162 = vmatpush1.bf16.msra.mxu0 0
  %163 = vmatprep.subr.bf16.mxu0 0
  %164 = vmatpush1.bf16.msra.mxu0 0
  %165 = vmatprep.subr.bf16.mxu0 0
  %166 = vmatpush1.bf16.msra.mxu0 0
  %167 = vmatprep.subr.bf16.mxu0 0
  %168 = vmatpush1.bf16.msra.mxu0 0
  %169 = vmatprep.subr.bf16.mxu0 0
  %170 = vmatpush1.bf16.msra.mxu0 0
  %171 = vmatprep.subr.bf16.mxu0 0
  %172 = vmatpush1.bf16.msra.mxu0 0
  %173 = vmatprep.subr.bf16.mxu0 0
  %174 = vmatpush1.bf16.msra.mxu0 0
  %175 = vmatprep.mubr.bf16.mxu0 0
  %176 = vmatmul.mubr.bf16.gmra.mrb[0].mxu0 %v79
  %v177 = vpop.f32.mrb[0].mxu0
  %v178 = vadd.f32 0.0, %v177
  %v179 = vpop.f32.mrb[0].mxu0
  %v180 = vpop.f32.mrb[0].mxu0
  %v181 = vadd.f32 0.0, %v180
  %v182 = vpop.f32.mrb[0].mxu0
  %183 = vmatprep.mubr.bf16.mxu0 0
  %184 = vmatmul.mubr.bf16.gmra.mrb[0].mxu0 %v80
  %v185 = vpop.f32.mrb[0].mxu0
  %v186 = vadd.f32 0.0, %v185
  %v187 = vpop.f32.mrb[0].mxu0
  %v188 = vpop.f32.mrb[0].mxu0
  %v189 = vadd.f32 0.0, %v188
  %v190 = vpop.f32.mrb[0].mxu0
  %191 = vmatprep.mubr.bf16.mxu0 0
  %192 = vmatmul.mubr.bf16.gmra.mrb[0].mxu0 %v81
  %v193 = vpop.f32.mrb[0].mxu0
  %v194 = vadd.f32 0.0, %v193
  %v195 = vpop.f32.mrb[0].mxu0
  %v196 = vpop.f32.mrb[0].mxu0
  %v197 = vadd.f32 0.0, %v196
  %v198 = vpop.f32.mrb[0].mxu0
  %199 = vmatprep.mubr.bf16.mxu0 0
  %200 = vmatmul.mubr.bf16.gmra.mrb[0].mxu0 %v82
  %v201 = vpop.f32.mrb[0].mxu0
  %v202 = vadd.f32 0.0, %v201
  %v203 = vpop.f32.mrb[0].mxu0
  %v204 = vpop.f32.mrb[0].mxu0
  %v205 = vadd.f32 0.0, %v204
  %v206 = vpop.f32.mrb[0].mxu0
  %207 = vmatprep.mubr.bf16.mxu0 0
  %208 = vmatmul.mubr.bf16.gmra.mrb[0].mxu0 %v83
  %v209 = vpop.f32.mrb[0].mxu0
  %v210 = vadd.f32 0.0, %v209
  %v211 = vpop.f32.mrb[0].mxu0
  %v212 = vpop.f32.mrb[0].mxu0
  %v213 = vadd.f32 0.0, %v212
  %v214 = vpop.f32.mrb[0].mxu0
  %215 = vmatprep.mubr.bf16.mxu0 0
  %216 = vmatmul.mubr.bf16.gmra.mrb[0].mxu0 %v84
  %v217 = vpop.f32.mrb[0].mxu0
  %v218 = vadd.f32 0.0, %v217
  %v219 = vpop.f32.mrb[0].mxu0
  %v220 = vpop.f32.mrb[0].mxu0
  %v221 = vadd.f32 0.0, %v220
  %v222 = vpop.f32.mrb[0].mxu0
  %223 = vmatprep.mubr.bf16.mxu0 0
  %224 = vmatmul.mubr.bf16.gmra.mrb[0].mxu0 %v85
  %v225 = vpop.f32.mrb[0].mxu0
  %v226 = vadd.f32 0.0, %v225
  %v227 = vpop.f32.mrb[0].mxu0
  %v228 = vpop.f32.mrb[0].mxu0
  %v229 = vadd.f32 0.0, %v228
  %v230 = vpop.f32.mrb[0].mxu0
  %231 = vmatprep.mubr.bf16.mxu0 0
  %232 = vmatmul.mubr.bf16.gmra.mrb[0].mxu0 %v86
  %v233 = vpop.f32.mrb[0].mxu0
  %v234 = vadd.f32 0.0, %v233
  %v235 = vpop.f32.mrb[0].mxu0
  %v236 = vpop.f32.mrb[0].mxu0
  %v237 = vadd.f32 0.0, %v236
  %v238 = vpop.f32.mrb[0].mxu0
  %239 = vdwg.mxu0
  %240 = vst [vmem:[%s2] sm:$0xff] %v178
  %241 = vst [vmem:[%s2 + $0x8] sm:$0xff] %v181
  %242 = vst [vmem:[%s2 + $0x10] sm:$0xff] %v186
  %243 = vst [vmem:[%s2 + $0x18] sm:$0xff] %v189
  %244 = vst [vmem:[%s2 + $0x20] sm:$0xff] %v194
  %245 = vst [vmem:[%s2 + $0x28] sm:$0xff] %v197
  %246 = vst [vmem:[%s2 + $0x30] sm:$0xff] %v202
  %247 = vst [vmem:[%s2 + $0x38] sm:$0xff] %v205
  %248 = vst [vmem:[%s2 + $0x40] sm:$0xff] %v210
  %249 = vst [vmem:[%s2 + $0x48] sm:$0xff] %v213
  %250 = vst [vmem:[%s2 + $0x50] sm:$0xff] %v218
  %251 = vst [vmem:[%s2 + $0x58] sm:$0xff] %v221
  %252 = vst [vmem:[%s2 + $0x60] sm:$0xff] %v226
  %253 = vst [vmem:[%s2 + $0x68] sm:$0xff] %v229
  %254 = vst [vmem:[%s2 + $0x70] sm:$0xff] %v234
  %255 = vst [vmem:[%s2 + $0x78] sm:$0xff] %v237
  %v256 = vadd.f32 %v178, %v181
  %v257 = vadd.f32 %v256, %v186
  %v258 = vadd.f32 %v257, %v189
  %v259 = vadd.f32 %v258, %v194
  %v260 = vadd.f32 %v259, %v197
  %v261 = vadd.f32 %v260, %v202
  %v262 = vadd.f32 %v261, %v205
  %v263 = vadd.f32 %v262, %v210
  %v264 = vadd.f32 %v263, %v213
  %v265 = vadd.f32 %v264, %v218
  %v266 = vadd.f32 %v265, %v221
  %v267 = vadd.f32 %v266, %v226
  %v268 = vadd.f32 %v267, %v229
  %v269 = vadd.f32 %v268, %v234
  %v270 = vadd.f32 %v269, %v237
  %v271 = vrot.slane %v270, 4
  %v272 = vadd.f32 %v270, %v271
  %v273 = vrot.slane %v272, 2
  %v274 = vadd.f32 %v272, %v273
  %v275 = vrot.slane %v274, 1
  %v276 = vadd.f32 %v274, %v275
  %277 = vst [vmem:[%s3] sm:$0xff] %v276
  %v278 = vmul.f32 %v178, %v178
  %v279 = vmul.f32 %v181, %v181
  %v280 = vmul.f32 %v186, %v186
  %v281 = vmul.f32 %v189, %v189
  %v282 = vmul.f32 %v194, %v194
  %v283 = vmul.f32 %v197, %v197
  %v284 = vmul.f32 %v202, %v202
  %v285 = vmul.f32 %v205, %v205
  %v286 = vmul.f32 %v210, %v210
  %v287 = vmul.f32 %v213, %v213
  %v288 = vmul.f32 %v218, %v218
  %v289 = vmul.f32 %v221, %v221
  %v290 = vmul.f32 %v226, %v226
  %v291 = vmul.f32 %v229, %v229
  %v292 = vmul.f32 %v234, %v234
  %v293 = vmul.f32 %v237, %v237
  %v294 = vadd.f32 %v278, %v279
  %v295 = vadd.f32 %v294, %v280
  %v296 = vadd.f32 %v295, %v281
  %v297 = vadd.f32 %v296, %v282
  %v298 = vadd.f32 %v297, %v283
  %v299 = vadd.f32 %v298, %v284
  %v300 = vadd.f32 %v299, %v285
  %v301 = vadd.f32 %v300, %v286
  %v302 = vadd.f32 %v301, %v287
  %v303 = vadd.f32 %v302, %v288
  %v304 = vadd.f32 %v303, %v289
  %v305 = vadd.f32 %v304, %v290
  %v306 = vadd.f32 %v305, %v291
  %v307 = vadd.f32 %v306, %v292
  %v308 = vadd.f32 %v307, %v293
  %v309 = vrot.slane %v308, 4
  %v310 = vadd.f32 %v308, %v309
  %v311 = vrot.slane %v310, 2
  %v312 = vadd.f32 %v310, %v311
  %v313 = vrot.slane %v312, 1
  %v314 = vadd.f32 %v312, %v313
  %315 = vst [vmem:[%s4] sm:$0xff] %v314
  // Predicated region
  $region10: #{bottleneck_forward.5} parent=0 // pred_check
    _
  $region11: #{bottleneck_forward.5} parent=0 // pred_check_branch
    %317 = sbr.rel (0) target = $region13
  $region12: #{bottleneck_forward.5} parent=0 // pred_region
    _
  $region13: #{bottleneck_forward.5} parent=0 // pred_fallthru
    _
  // Predicated region
  $region14: #{bottleneck_forward.5} parent=0 // pred_check
    _
  $region15: #{bottleneck_forward.5} parent=0 // pred_check_branch
    %319 = sbr.rel (0) target = $region17
  $region16: #{bottleneck_forward.5} parent=0 // pred_region
    _
  $region17: #{bottleneck_forward.5} parent=0 // pred_fallthru
    _
  // Predicated region
  $region18: #{bottleneck_forward.5} parent=0 // pred_check
    _
  $region19: #{bottleneck_forward.5} parent=0 // pred_check_branch
    %321 = sbr.rel (0) target = $region21
  $region20: #{bottleneck_forward.5} parent=0 // pred_region
    _
  $region21: #{bottleneck_forward.5} parent=0 // pred_fallthru
    _
  // Predicated region
  $region22: #{bottleneck_forward.5} parent=0 // pred_check
    _
  $region23: #{bottleneck_forward.5} parent=0 // pred_check_branch
    %323 = sbr.rel (0) target = $region25
  $region24: #{bottleneck_forward.5} parent=0 // pred_region
    _
  $region25: #{bottleneck_forward.5} parent=0 // pred_fallthru
    _
  // Predicated region
  $region26: #{bottleneck_forward.5} parent=0 // pred_check
    _
  $region27: #{bottleneck_forward.5} parent=0 // pred_check_branch
    %325 = sbr.rel (0) target = $region29
  $region28: #{bottleneck_forward.5} parent=0 // pred_region
    _
  $region29: #{bottleneck_forward.5} parent=0 // pred_fallthru
    _
  // Predicated region
  $region30: #{bottleneck_forward.5} parent=0 // pred_check
    _
  $region31: #{bottleneck_forward.5} parent=0 // pred_check_branch
    %327 = sbr.rel (0) target = $region33
  $region32: #{bottleneck_forward.5} parent=0 // pred_region
    _
  $region33: #{bottleneck_forward.5} parent=0 // pred_fallthru
    _

// kernel: bottleneck_forward.9
$region0: #{bottleneck_forward.9}
  #allocation0 [shape = 'u32[]', space=smem, size = 0x4, offset = 0x4, fixed_abs, tag = 'smem constant byte address 0x4 - core index']
  #allocation1 [shape = 'u32[144,128]{1,0:T(1,128)}', space=vmem, size = 0x12000, scoped, tag = 'internal scratch']
  %s0 = inlined_call_operand.vmem [shape: f32[32,128], index: 0, kind: input, shape index: {}]
  %s1 = inlined_call_operand.vmem [shape: f32[1,128], index: 1, kind: input, shape index: {}]
  %s2 = inlined_call_operand.vmem [shape: f32[1,128], index: 2, kind: input, shape index: {}]
  %s3 = inlined_call_operand.vmem [shape: f32[32,128], index: 3, kind: input, shape index: {}]
  %s4 = inlined_call_operand.vmem [shape: f32[1,128], index: 4, kind: input, shape index: {}]
  %s5 = inlined_call_operand.vmem [shape: f32[1,128], index: 5, kind: input, shape index: {}]
  %s6 = inlined_call_operand.hbm [shape: f32[32,128], index: 6, kind: output, shape index: {}]
  %s7 = sld [smem:[#allocation0]]
  $region34: #{bottleneck_forward.9} parent=0
    _
  %s9 = ssub.s32 1, %s7
  %s10 = scalar_select 0, %s9, %s7
  $region1: #{bottleneck_forward.9} parent=0
    #allocation2 [shape = 'u8[16384]{0}', space=vmem, size = 0x4000, scoped, tag = 'output window, operand 0, single buffered']
    #allocation3 [shape = 's32[1]{0}', space=sflag, size = 0x4, scoped, tag = 'scoped memory for bottleneck_forward.9']
    %11 = vsyncpa [#allocation3], 0
    // Predicated region
    $region2: #{bottleneck_forward.9} parent=1 // pred_check
      _
    $region3: #{bottleneck_forward.9} parent=1 // pred_check_branch
      %13 = sbr.rel (0) target = $region5
    $region4: #{bottleneck_forward.9} parent=1 // pred_region
      _
    $region5: #{bottleneck_forward.9} parent=1 // pred_fallthru
      _
    // Predicated region
    $region6: #{bottleneck_forward.9} parent=1 // pred_check
      _
    $region7: #{bottleneck_forward.9} parent=1 // pred_check_branch
      %15 = sbr.rel (0) target = $region9
    $region8: #{bottleneck_forward.9} parent=1 // pred_region
      _
    $region9: #{bottleneck_forward.9} parent=1 // pred_fallthru
      _
    // Predicated region
    $region10: #{bottleneck_forward.9} parent=1 // pred_check
      _
    $region11: #{bottleneck_forward.9} parent=1 // pred_check_branch
      %17 = sbr.rel (0) target = $region13
    $region12: #{bottleneck_forward.9} parent=1 // pred_region
      _
    $region13: #{bottleneck_forward.9} parent=1 // pred_fallthru
      _
    // Predicated region
    $region14: #{bottleneck_forward.9} parent=1 // pred_check
      _
    $region15: #{bottleneck_forward.9} parent=1 // pred_check_branch
      %19 = sbr.rel (0) target = $region17
    $region16: #{bottleneck_forward.9} parent=1 // pred_region
      _
    $region17: #{bottleneck_forward.9} parent=1 // pred_fallthru
      _
    // Predicated region
    $region18: #{bottleneck_forward.9} parent=1 // pred_check
      _
    $region19: #{bottleneck_forward.9} parent=1 // pred_check_branch
      %21 = sbr.rel (0) target = $region21
    $region20: #{bottleneck_forward.9} parent=1 // pred_region
      _
    $region21: #{bottleneck_forward.9} parent=1 // pred_fallthru
      _
    // Predicated region
    $region22: #{bottleneck_forward.9} parent=1 // pred_check
      _
    $region23: #{bottleneck_forward.9} parent=1 // pred_check_branch
      %23 = sbr.rel (0) target = $region25
    $region24: #{bottleneck_forward.9} parent=1 // pred_region
      _
    $region25: #{bottleneck_forward.9} parent=1 // pred_fallthru
      _
    %v24 = vld [vmem:[%s3] sm:$0xff]
    %v25 = vld [vmem:[%s3 + $0x8] sm:$0xff]
    %v26 = vld [vmem:[%s3 + $0x10] sm:$0xff]
    %v27 = vld [vmem:[%s3 + $0x18] sm:$0xff]
    %v28 = vld [vmem:[%s4] sm:$0x1]
    %v30 = vlaneseq
    %v31 = vshrl.u32 %v30, 7
    %v32 = vsub.s32 0, %v31
    %v33 = vrot.slane %v28, %v32
    %v35 = vmul.f32 %v24, %v33
    %v36 = vmul.f32 %v25, %v33
    %v37 = vmul.f32 %v26, %v33
    %v38 = vmul.f32 %v27, %v33
    %v39 = vld [vmem:[%s5] sm:$0x1]
    %v41 = vlaneseq
    %v42 = vshrl.u32 %v41, 7
    %v43 = vsub.s32 0, %v42
    %v44 = vrot.slane %v39, %v43
    %v46 = vadd.f32 %v35, %v44
    %v47 = vadd.f32 %v36, %v44
    %v48 = vadd.f32 %v37, %v44
    %v49 = vadd.f32 %v38, %v44
    %v50 = vld [vmem:[%s0] sm:$0xff]
    %v51 = vld [vmem:[%s0 + $0x8] sm:$0xff]
    %v52 = vld [vmem:[%s0 + $0x10] sm:$0xff]
    %v53 = vld [vmem:[%s0 + $0x18] sm:$0xff]
    %v54 = vld [vmem:[%s1] sm:$0x1]
    %v56 = vlaneseq
    %v57 = vshrl.u32 %v56, 7
    %v58 = vsub.s32 0, %v57
    %v59 = vrot.slane %v54, %v58
    %v61 = vmul.f32 %v50, %v59
    %v62 = vmul.f32 %v51, %v59
    %v63 = vmul.f32 %v52, %v59
    %v64 = vmul.f32 %v53, %v59
    %v65 = vld [vmem:[%s2] sm:$0x1]
    %v67 = vlaneseq
    %v68 = vshrl.u32 %v67, 7
    %v69 = vsub.s32 0, %v68
    %v70 = vrot.slane %v65, %v69
    %v72 = vadd.f32 %v61, %v70
    %v73 = vadd.f32 %v62, %v70
    %v74 = vadd.f32 %v63, %v70
    %v75 = vadd.f32 %v64, %v70
    %v76 = vadd.f32 %v72, %v46
    %v77 = vadd.f32 %v73, %v47
    %v78 = vadd.f32 %v74, %v48
    %v79 = vadd.f32 %v75, %v49
    %v80 = vmax.f32 %v76, 0.0
    %v81 = vmax.f32 %v77, 0.0
    %v82 = vmax.f32 %v78, 0.0
    %v83 = vmax.f32 %v79, 0.0
    %84 = vst [vmem:[#allocation2] sm:$0xff] %v80
    %85 = vst [vmem:[#allocation2 + $0x8] sm:$0xff] %v81
    %86 = vst [vmem:[#allocation2 + $0x10] sm:$0xff] %v82
    %87 = vst [vmem:[#allocation2 + $0x18] sm:$0xff] %v83
    // Predicated region
    $region26: #{bottleneck_forward.9} parent=1 // pred_check
      _
    $region27: #{bottleneck_forward.9} parent=1 // pred_check_branch
      %89 = sbr.rel (0) target = $region29
    $region28: #{bottleneck_forward.9} parent=1 // pred_region
      %s91 = ssub.s32 512, 512
      %92 = vsyncadd [#allocation3], %s91
      %s93 = sshll.u32 [#allocation2], 4
      %s94 = int_to_ptr.vmem [resolvable:$true] %s93
      %99 = dma.vmem_to_hbm [thread:$0]  %s94, 512, %s6, [#allocation3], 128, 128, 8
    $region29: #{bottleneck_forward.9} parent=1 // pred_fallthru
      _
    // Predicated region
    $region30: #{bottleneck_forward.9} parent=1 // pred_check
      _
    $region31: #{bottleneck_forward.9} parent=1 // pred_check_branch
      %101 = sbr.rel (0) target = $region33
    $region32: #{bottleneck_forward.9} parent=1 // pred_region
      %102 = dma.done [#allocation3], 512
    $region33: #{bottleneck_forward.9} parent=1 // pred_fallthru
      _
    %103 = vsyncpa [#allocation3], 1

// kernel: bottleneck_forward.8
$region0: #{bottleneck_forward.8}
  #allocation0 [shape = 'u32[]', space=smem, size = 0x4, offset = 0x4, fixed_abs, tag = 'smem constant byte address 0x4 - core index']
  #allocation1 [shape = 'u32[144,128]{1,0:T(1,128)}', space=vmem, size = 0x12000, scoped, tag = 'internal scratch']
  %s0 = inlined_call_operand.vmem [shape: f32[32,128], index: 0, kind: input, shape index: {}]
  %s1 = inlined_call_operand.vmem [shape: f32[1,128], index: 1, kind: input, shape index: {}]
  %s2 = inlined_call_operand.vmem [shape: f32[1,128], index: 2, kind: input, shape index: {}]
  %s3 = inlined_call_operand.vmem [shape: bf16[128,128], index: 3, kind: input, shape index: {}]
  %s4 = inlined_call_operand.vmem [shape: bf16[32,128], index: 4, kind: input, shape index: {}]
  %s5 = inlined_call_operand.vmem [shape: bf16[128,128], index: 5, kind: input, shape index: {}]
  %s6 = inlined_call_operand.vmem [shape: f32[32,128], index: 6, kind: output, shape index: {0}]
  %s7 = inlined_call_operand.vmem [shape: f32[1,8,128], index: 7, kind: output, shape index: {1}]
  %s8 = inlined_call_operand.vmem [shape: f32[1,8,128], index: 8, kind: output, shape index: {2}]
  %s9 = inlined_call_operand.vmem [shape: f32[32,128], index: 9, kind: output, shape index: {3}]
  %s10 = inlined_call_operand.vmem [shape: f32[1,8,128], index: 10, kind: output, shape index: {4}]
  %s11 = inlined_call_operand.vmem [shape: f32[1,8,128], index: 11, kind: output, shape index: {5}]
  %12 = xla_tuple %s6, %s7, %s8, %s9, %s10, %s11
  %s13 = sld [smem:[#allocation0]]
  $region74: #{bottleneck_forward.8} parent=0
    _
  %s15 = ssub.s32 1, %s13
  %s16 = scalar_select 0, %s15, %s13
  // Predicated region
  $region2: #{bottleneck_forward.8} parent=0 // pred_check
    _
  $region3: #{bottleneck_forward.8} parent=0 // pred_check_branch
    %18 = sbr.rel (0) target = $region5
  $region4: #{bottleneck_forward.8} parent=0 // pred_region
    _
  $region5: #{bottleneck_forward.8} parent=0 // pred_fallthru
    _
  // Predicated region
  $region6: #{bottleneck_forward.8} parent=0 // pred_check
    _
  $region7: #{bottleneck_forward.8} parent=0 // pred_check_branch
    %20 = sbr.rel (0) target = $region9
  $region8: #{bottleneck_forward.8} parent=0 // pred_region
    _
  $region9: #{bottleneck_forward.8} parent=0 // pred_fallthru
    _
  // Predicated region
  $region10: #{bottleneck_forward.8} parent=0 // pred_check
    _
  $region11: #{bottleneck_forward.8} parent=0 // pred_check_branch
    %22 = sbr.rel (0) target = $region13
  $region12: #{bottleneck_forward.8} parent=0 // pred_region
    _
  $region13: #{bottleneck_forward.8} parent=0 // pred_fallthru
    _
  // Predicated region
  $region14: #{bottleneck_forward.8} parent=0 // pred_check
    _
  $region15: #{bottleneck_forward.8} parent=0 // pred_check_branch
    %24 = sbr.rel (0) target = $region17
  $region16: #{bottleneck_forward.8} parent=0 // pred_region
    _
  $region17: #{bottleneck_forward.8} parent=0 // pred_fallthru
    _
  // Predicated region
  $region18: #{bottleneck_forward.8} parent=0 // pred_check
    _
  $region19: #{bottleneck_forward.8} parent=0 // pred_check_branch
    %26 = sbr.rel (0) target = $region21
  $region20: #{bottleneck_forward.8} parent=0 // pred_region
    _
  $region21: #{bottleneck_forward.8} parent=0 // pred_fallthru
    _
  // Predicated region
  $region22: #{bottleneck_forward.8} parent=0 // pred_check
    _
  $region23: #{bottleneck_forward.8} parent=0 // pred_check_branch
    %28 = sbr.rel (0) target = $region25
  $region24: #{bottleneck_forward.8} parent=0 // pred_region
    _
  $region25: #{bottleneck_forward.8} parent=0 // pred_fallthru
    _
  %v30 = vld [vmem:[%s0] sm:$0xff]
  %v31 = vld [vmem:[%s0 + $0x8] sm:$0xff]
  %v32 = vld [vmem:[%s0 + $0x10] sm:$0xff]
  %v33 = vld [vmem:[%s0 + $0x18] sm:$0xff]
  %v34 = vld [vmem:[%s1] sm:$0x1]
  %v36 = vlaneseq
  %v37 = vshrl.u32 %v36, 7
  %v38 = vsub.s32 0, %v37
  %v39 = vrot.slane %v34, %v38
  %v41 = vmul.f32 %v30, %v39
  %v42 = vmul.f32 %v31, %v39
  %v43 = vmul.f32 %v32, %v39
  %v44 = vmul.f32 %v33, %v39
  %v45 = vld [vmem:[%s2] sm:$0x1]
  %v47 = vlaneseq
  %v48 = vshrl.u32 %v47, 7
  %v49 = vsub.s32 0, %v48
  %v50 = vrot.slane %v45, %v49
  %v52 = vadd.f32 %v41, %v50
  %v53 = vadd.f32 %v42, %v50
  %v54 = vadd.f32 %v43, %v50
  %v55 = vadd.f32 %v44, %v50
  %v56 = vmax.f32 %v52, 0.0
  %v57 = vmax.f32 %v53, 0.0
  %v58 = vmax.f32 %v54, 0.0
  %v59 = vmax.f32 %v55, 0.0
  %v60 = vpack.c.bf16 %v57, %v56
  %v61 = vpack.c.bf16 %v59, %v58
  %v62 = vld [vmem:[%s3] sm:$0xf]
  %v63 = vld [vmem:[%s3 + $0x4] sm:$0xf]
  %v64 = vld [vmem:[%s3 + $0x8] sm:$0xf]
  %v65 = vld [vmem:[%s3 + $0xc] sm:$0xf]
  %v66 = vld [vmem:[%s3 + $0x10] sm:$0xf]
  %v67 = vld [vmem:[%s3 + $0x14] sm:$0xf]
  %v68 = vld [vmem:[%s3 + $0x18] sm:$0xf]
  %v69 = vld [vmem:[%s3 + $0x1c] sm:$0xf]
  %v70 = vld [vmem:[%s3 + $0x20] sm:$0xf]
  %v71 = vld [vmem:[%s3 + $0x24] sm:$0xf]
  %v72 = vld [vmem:[%s3 + $0x28] sm:$0xf]
  %v73 = vld [vmem:[%s3 + $0x2c] sm:$0xf]
  %v74 = vld [vmem:[%s3 + $0x30] sm:$0xf]
  %v75 = vld [vmem:[%s3 + $0x34] sm:$0xf]
  %v76 = vld [vmem:[%s3 + $0x38] sm:$0xf]
  %v77 = vld [vmem:[%s3 + $0x3c] sm:$0xf]
  %v94 = vunpack.c.l.b16 %v62
  %v95 = vunpack.c.l.b16 %v63
  %v96 = vunpack.c.l.b16 %v64
  %v97 = vunpack.c.l.b16 %v65
  %v98 = vunpack.c.l.b16 %v66
  %v99 = vunpack.c.l.b16 %v67
  %v100 = vunpack.c.l.b16 %v68
  %v101 = vunpack.c.l.b16 %v69
  %v102 = vunpack.c.l.b16 %v70
  %v103 = vunpack.c.l.b16 %v71
  %v104 = vunpack.c.l.b16 %v72
  %v105 = vunpack.c.l.b16 %v73
  %v106 = vunpack.c.l.b16 %v74
  %v107 = vunpack.c.l.b16 %v75
  %v108 = vunpack.c.l.b16 %v76
  %v109 = vunpack.c.l.b16 %v77
  %v110 = vpack.c.b16 %v95, %v94
  %v111 = vpack.c.b16 %v97, %v96
  %v112 = vpack.c.b16 %v99, %v98
  %v113 = vpack.c.b16 %v101, %v100
  %v114 = vpack.c.b16 %v103, %v102
  %v115 = vpack.c.b16 %v105, %v104
  %v116 = vpack.c.b16 %v107, %v106
  %v117 = vpack.c.b16 %v109, %v108
  %126 = vmatprep.subr.bf16.mxu0 0
  %127 = vmatpush1.bf16.msra.mxu0 %v110
  %128 = vmatprep.subr.bf16.mxu0 0
  %129 = vmatpush1.bf16.msra.mxu0 %v111
  %130 = vmatprep.subr.bf16.mxu0 0
  %131 = vmatpush1.bf16.msra.mxu0 %v112
  %132 = vmatprep.subr.bf16.mxu0 0
  %133 = vmatpush1.bf16.msra.mxu0 %v113
  %134 = vmatprep.subr.bf16.mxu0 0
  %135 = vmatpush1.bf16.msra.mxu0 %v114
  %136 = vmatprep.subr.bf16.mxu0 0
  %137 = vmatpush1.bf16.msra.mxu0 %v115
  %138 = vmatprep.subr.bf16.mxu0 0
  %139 = vmatpush1.bf16.msra.mxu0 %v116
  %140 = vmatprep.subr.bf16.mxu0 0
  %141 = vmatpush1.bf16.msra.mxu0 %v117
  %142 = vmatprep.subr.bf16.mxu0 0
  %143 = vmatpush1.bf16.msra.mxu0 0
  %144 = vmatprep.subr.bf16.mxu0 0
  %145 = vmatpush1.bf16.msra.mxu0 0
  %146 = vmatprep.subr.bf16.mxu0 0
  %147 = vmatpush1.bf16.msra.mxu0 0
  %148 = vmatprep.subr.bf16.mxu0 0
  %149 = vmatpush1.bf16.msra.mxu0 0
  %150 = vmatprep.subr.bf16.mxu0 0
  %151 = vmatpush1.bf16.msra.mxu0 0
  %152 = vmatprep.subr.bf16.mxu0 0
  %153 = vmatpush1.bf16.msra.mxu0 0
  %154 = vmatprep.subr.bf16.mxu0 0
  %155 = vmatpush1.bf16.msra.mxu0 0
  %156 = vmatprep.subr.bf16.mxu0 0
  %157 = vmatpush1.bf16.msra.mxu0 0
  %158 = vmatprep.mubr.bf16.mxu0 0
  %159 = vmatmul.mubr.bf16.gmra.mrb[0].mxu0 %v60
  %v160 = vpop.f32.mrb[0].mxu0
  %v161 = vadd.f32 0.0, %v160
  %v162 = vpop.f32.mrb[0].mxu0
  %v163 = vpop.f32.mrb[0].mxu0
  %v164 = vadd.f32 0.0, %v163
  %v165 = vpop.f32.mrb[0].mxu0
  %166 = vmatprep.mubr.bf16.mxu0 0
  %167 = vmatmul.mubr.bf16.gmra.mrb[0].mxu0 %v61
  %v168 = vpop.f32.mrb[0].mxu0
  %v169 = vadd.f32 0.0, %v168
  %v170 = vpop.f32.mrb[0].mxu0
  %v171 = vpop.f32.mrb[0].mxu0
  %v172 = vadd.f32 0.0, %v171
  %v173 = vpop.f32.mrb[0].mxu0
  %174 = vdwg.mxu0
  %175 = vst [vmem:[%s6] sm:$0xff] %v161
  %176 = vst [vmem:[%s6 + $0x8] sm:$0xff] %v164
  %177 = vst [vmem:[%s6 + $0x10] sm:$0xff] %v169
  %178 = vst [vmem:[%s6 + $0x18] sm:$0xff] %v172
  %v179 = vadd.f32 %v161, %v164
  %v180 = vadd.f32 %v179, %v169
  %v181 = vadd.f32 %v180, %v172
  %v182 = vrot.slane %v181, 4
  %v183 = vadd.f32 %v181, %v182
  %v184 = vrot.slane %v183, 2
  %v185 = vadd.f32 %v183, %v184
  %v186 = vrot.slane %v185, 1
  %v187 = vadd.f32 %v185, %v186
  %188 = vst [vmem:[%s7] sm:$0xff] %v187
  %v189 = vmul.f32 %v161, %v161
  %v190 = vmul.f32 %v164, %v164
  %v191 = vmul.f32 %v169, %v169
  %v192 = vmul.f32 %v172, %v172
  %v193 = vadd.f32 %v189, %v190
  %v194 = vadd.f32 %v193, %v191
  %v195 = vadd.f32 %v194, %v192
  %v196 = vrot.slane %v195, 4
  %v197 = vadd.f32 %v195, %v196
  %v198 = vrot.slane %v197, 2
  %v199 = vadd.f32 %v197, %v198
  %v200 = vrot.slane %v199, 1
  %v201 = vadd.f32 %v199, %v200
  %202 = vst [vmem:[%s8] sm:$0xff] %v201
  %v203 = vld [vmem:[%s4] sm:$0xf]
  %v204 = vld [vmem:[%s4 + $0x4] sm:$0xf]
  %v205 = vld [vmem:[%s4 + $0x8] sm:$0xf]
  %v206 = vld [vmem:[%s4 + $0xc] sm:$0xf]
  %v207 = vld [vmem:[%s5] sm:$0xf]
  %v208 = vld [vmem:[%s5 + $0x4] sm:$0xf]
  %v209 = vld [vmem:[%s5 + $0x8] sm:$0xf]
  %v210 = vld [vmem:[%s5 + $0xc] sm:$0xf]
  %v211 = vld [vmem:[%s5 + $0x10] sm:$0xf]
  %v212 = vld [vmem:[%s5 + $0x14] sm:$0xf]
  %v213 = vld [vmem:[%s5 + $0x18] sm:$0xf]
  %v214 = vld [vmem:[%s5 + $0x1c] sm:$0xf]
  %v215 = vld [vmem:[%s5 + $0x20] sm:$0xf]
  %v216 = vld [vmem:[%s5 + $0x24] sm:$0xf]
  %v217 = vld [vmem:[%s5 + $0x28] sm:$0xf]
  %v218 = vld [vmem:[%s5 + $0x2c] sm:$0xf]
  %v219 = vld [vmem:[%s5 + $0x30] sm:$0xf]
  %v220 = vld [vmem:[%s5 + $0x34] sm:$0xf]
  %v221 = vld [vmem:[%s5 + $0x38] sm:$0xf]
  %v222 = vld [vmem:[%s5 + $0x3c] sm:$0xf]
  %v227 = vunpack.c.l.b16 %v203
  %v228 = vunpack.c.l.b16 %v204
  %v229 = vunpack.c.l.b16 %v205
  %v230 = vunpack.c.l.b16 %v206
  %v231 = vpack.c.b16 %v228, %v227
  %v232 = vpack.c.b16 %v230, %v229
  %v251 = vunpack.c.l.b16 %v207
  %v252 = vunpack.c.l.b16 %v208
  %v253 = vunpack.c.l.b16 %v209
  %v254 = vunpack.c.l.b16 %v210
  %v255 = vunpack.c.l.b16 %v211
  %v256 = vunpack.c.l.b16 %v212
  %v257 = vunpack.c.l.b16 %v213
  %v258 = vunpack.c.l.b16 %v214
  %v259 = vunpack.c.l.b16 %v215
  %v260 = vunpack.c.l.b16 %v216
  %v261 = vunpack.c.l.b16 %v217
  %v262 = vunpack.c.l.b16 %v218
  %v263 = vunpack.c.l.b16 %v219
  %v264 = vunpack.c.l.b16 %v220
  %v265 = vunpack.c.l.b16 %v221
  %v266 = vunpack.c.l.b16 %v222
  %v267 = vpack.c.b16 %v252, %v251
  %v268 = vpack.c.b16 %v254, %v253
  %v269 = vpack.c.b16 %v256, %v255
  %v270 = vpack.c.b16 %v258, %v257
  %v271 = vpack.c.b16 %v260, %v259
  %v272 = vpack.c.b16 %v262, %v261
  %v273 = vpack.c.b16 %v264, %v263
  %v274 = vpack.c.b16 %v266, %v265
  %283 = vmatprep.subr.bf16.mxu0 0
  %284 = vmatpush1.bf16.msra.mxu0 %v267
  %285 = vmatprep.subr.bf16.mxu0 0
  %286 = vmatpush1.bf16.msra.mxu0 %v268
  %287 = vmatprep.subr.bf16.mxu0 0
  %288 = vmatpush1.bf16.msra.mxu0 %v269
  %289 = vmatprep.subr.bf16.mxu0 0
  %290 = vmatpush1.bf16.msra.mxu0 %v270
  %291 = vmatprep.subr.bf16.mxu0 0
  %292 = vmatpush1.bf16.msra.mxu0 %v271
  %293 = vmatprep.subr.bf16.mxu0 0
  %294 = vmatpush1.bf16.msra.mxu0 %v272
  %295 = vmatprep.subr.bf16.mxu0 0
  %296 = vmatpush1.bf16.msra.mxu0 %v273
  %297 = vmatprep.subr.bf16.mxu0 0
  %298 = vmatpush1.bf16.msra.mxu0 %v274
  %299 = vmatprep.subr.bf16.mxu0 0
  %300 = vmatpush1.bf16.msra.mxu0 0
  %301 = vmatprep.subr.bf16.mxu0 0
  %302 = vmatpush1.bf16.msra.mxu0 0
  %303 = vmatprep.subr.bf16.mxu0 0
  %304 = vmatpush1.bf16.msra.mxu0 0
  %305 = vmatprep.subr.bf16.mxu0 0
  %306 = vmatpush1.bf16.msra.mxu0 0
  %307 = vmatprep.subr.bf16.mxu0 0
  %308 = vmatpush1.bf16.msra.mxu0 0
  %309 = vmatprep.subr.bf16.mxu0 0
  %310 = vmatpush1.bf16.msra.mxu0 0
  %311 = vmatprep.subr.bf16.mxu0 0
  %312 = vmatpush1.bf16.msra.mxu0 0
  %313 = vmatprep.subr.bf16.mxu0 0
  %314 = vmatpush1.bf16.msra.mxu0 0
  %315 = vmatprep.mubr.bf16.mxu0 0
  %316 = vmatmul.mubr.bf16.gmra.mrb[0].mxu0 %v231
  %v317 = vpop.f32.mrb[0].mxu0
  %v318 = vadd.f32 0.0, %v317
  %v319 = vpop.f32.mrb[0].mxu0
  %v320 = vpop.f32.mrb[0].mxu0
  %v321 = vadd.f32 0.0, %v320
  %v322 = vpop.f32.mrb[0].mxu0
  %323 = vmatprep.mubr.bf16.mxu0 0
  %324 = vmatmul.mubr.bf16.gmra.mrb[0].mxu0 %v232
  %v325 = vpop.f32.mrb[0].mxu0
  %v326 = vadd.f32 0.0, %v325
  %v327 = vpop.f32.mrb[0].mxu0
  %v328 = vpop.f32.mrb[0].mxu0
  %v329 = vadd.f32 0.0, %v328
  %v330 = vpop.f32.mrb[0].mxu0
  %331 = vdwg.mxu0
  %332 = vst [vmem:[%s9] sm:$0xff] %v318
  %333 = vst [vmem:[%s9 + $0x8] sm:$0xff] %v321
  %334 = vst [vmem:[%s9 + $0x10] sm:$0xff] %v326
  %335 = vst [vmem:[%s9 + $0x18] sm:$0xff] %v329
  %v336 = vadd.f32 %v318, %v321
  %v337 = vadd.f32 %v336, %v326
  %v338 = vadd.f32 %v337, %v329
  %v339 = vrot.slane %v338, 4
  %v340 = vadd.f32 %v338, %v339
  %v341 = vrot.slane %v340, 2
  %v342 = vadd.f32 %v340, %v341
  %v343 = vrot.slane %v342, 1
  %v344 = vadd.f32 %v342, %v343
  %345 = vst [vmem:[%s10] sm:$0xff] %v344
  %v346 = vmul.f32 %v318, %v318
  %v347 = vmul.f32 %v321, %v321
  %v348 = vmul.f32 %v326, %v326
  %v349 = vmul.f32 %v329, %v329
  %v350 = vadd.f32 %v346, %v347
  %v351 = vadd.f32 %v350, %v348
  %v352 = vadd.f32 %v351, %v349
  %v353 = vrot.slane %v352, 4
  %v354 = vadd.f32 %v352, %v353
  %v355 = vrot.slane %v354, 2
  %v356 = vadd.f32 %v354, %v355
  %v357 = vrot.slane %v356, 1
  %v358 = vadd.f32 %v356, %v357
  %359 = vst [vmem:[%s11] sm:$0xff] %v358
  // Predicated region
  $region26: #{bottleneck_forward.8} parent=0 // pred_check
    _
  $region27: #{bottleneck_forward.8} parent=0 // pred_check_branch
    %361 = sbr.rel (0) target = $region29
  $region28: #{bottleneck_forward.8} parent=0 // pred_region
    _
  $region29: #{bottleneck_forward.8} parent=0 // pred_fallthru
    _
  // Predicated region
  $region30: #{bottleneck_forward.8} parent=0 // pred_check
    _
  $region31: #{bottleneck_forward.8} parent=0 // pred_check_branch
    %363 = sbr.rel (0) target = $region33
  $region32: #{bottleneck_forward.8} parent=0 // pred_region
    _
  $region33: #{bottleneck_forward.8} parent=0 // pred_fallthru
    _
  // Predicated region
  $region34: #{bottleneck_forward.8} parent=0 // pred_check
    _
  $region35: #{bottleneck_forward.8} parent=0 // pred_check_branch
    %365 = sbr.rel (0) target = $region37
  $region36: #{bottleneck_forward.8} parent=0 // pred_region
    _
  $region37: #{bottleneck_forward.8} parent=0 // pred_fallthru
    _
  // Predicated region
  $region38: #{bottleneck_forward.8} parent=0 // pred_check
    _
  $region39: #{bottleneck_forward.8} parent=0 // pred_check_branch
    %367 = sbr.rel (0) target = $region41
  $region40: #{bottleneck_forward.8} parent=0 // pred_region
    _
  $region41: #{bottleneck_forward.8} parent=0 // pred_fallthru
    _
  // Predicated region
  $region42: #{bottleneck_forward.8} parent=0 // pred_check
    _
  $region43: #{bottleneck_forward.8} parent=0 // pred_check_branch
    %369 = sbr.rel (0) target = $region45
  $region44: #{bottleneck_forward.8} parent=0 // pred_region
    _
  $region45: #{bottleneck_forward.8} parent=0 // pred_fallthru
    _
  // Predicated region
  $region46: #{bottleneck_forward.8} parent=0 // pred_check
    _
  $region47: #{bottleneck_forward.8} parent=0 // pred_check_branch
    %371 = sbr.rel (0) target = $region49
  $region48: #{bottleneck_forward.8} parent=0 // pred_region
    _
  $region49: #{bottleneck_forward.8} parent=0 // pred_fallthru
    _
  // Predicated region
  $region50: #{bottleneck_forward.8} parent=0 // pred_check
    _
  $region51: #{bottleneck_forward.8} parent=0 // pred_check_branch
    %373 = sbr.rel (0) target = $region53
  $region52: #{bottleneck_forward.8} parent=0 // pred_region
    _
  $region53: #{bottleneck_forward.8} parent=0 // pred_fallthru
    _
  // Predicated region
  $region54: #{bottleneck_forward.8} parent=0 // pred_check
    _
  $region55: #{bottleneck_forward.8} parent=0 // pred_check_branch
    %375 = sbr.rel (0) target = $region57
  $region56: #{bottleneck_forward.8} parent=0 // pred_region
    _
  $region57: #{bottleneck_forward.8} parent=0 // pred_fallthru
    _
  // Predicated region
  $region58: #{bottleneck_forward.8} parent=0 // pred_check
    _
  $region59: #{bottleneck_forward.8} parent=0 // pred_check_branch
    %377 = sbr.rel (0) target = $region61
  $region60: #{bottleneck_forward.8} parent=0 // pred_region
    _
  $region61: #{bottleneck_forward.8} parent=0 // pred_fallthru
    _
  // Predicated region
  $region62: #{bottleneck_forward.8} parent=0 // pred_check
    _
  $region63: #{bottleneck_forward.8} parent=0 // pred_check_branch
    %379 = sbr.rel (0) target = $region65
  $region64: #{bottleneck_forward.8} parent=0 // pred_region
    _
  $region65: #{bottleneck_forward.8} parent=0 // pred_fallthru
    _
  // Predicated region
  $region66: #{bottleneck_forward.8} parent=0 // pred_check
    _
  $region67: #{bottleneck_forward.8} parent=0 // pred_check_branch
    %381 = sbr.rel (0) target = $region69
  $region68: #{bottleneck_forward.8} parent=0 // pred_region
    _
  $region69: #{bottleneck_forward.8} parent=0 // pred_fallthru
    _
  // Predicated region
  $region70: #{bottleneck_forward.8} parent=0 // pred_check
    _
  $region71: #{bottleneck_forward.8} parent=0 // pred_check_branch
    %383 = sbr.rel (0) target = $region73
  $region72: #{bottleneck_forward.8} parent=0 // pred_region
    _
  $region73: #{bottleneck_forward.8} parent=0 // pred_fallthru
    _

// kernel: bottleneck_forward.7
$region0: #{bottleneck_forward.7}
  #allocation0 [shape = 'u32[]', space=smem, size = 0x4, offset = 0x4, fixed_abs, tag = 'smem constant byte address 0x4 - core index']
  #allocation1 [shape = 'u32[144,128]{1,0:T(1,128)}', space=vmem, size = 0x12000, scoped, tag = 'internal scratch']
  %s0 = inlined_call_operand.vmem [shape: bf16[9,32,128], index: 0, kind: input, shape index: {}]
  %s1 = inlined_call_operand.vmem [shape: bf16[9,128,128], index: 1, kind: input, shape index: {}]
  %s2 = inlined_call_operand.vmem [shape: f32[32,128], index: 2, kind: output, shape index: {0}]
  %s3 = inlined_call_operand.vmem [shape: f32[1,8,128], index: 3, kind: output, shape index: {1}]
  %s4 = inlined_call_operand.vmem [shape: f32[1,8,128], index: 4, kind: output, shape index: {2}]
  %5 = xla_tuple %s2, %s3, %s4
  %s6 = sld [smem:[#allocation0]]
  $region34: #{bottleneck_forward.7} parent=0
    _
  %s8 = ssub.s32 1, %s6
  %s9 = scalar_select 0, %s8, %s6
  // Predicated region
  $region2: #{bottleneck_forward.7} parent=0 // pred_check
    _
  $region3: #{bottleneck_forward.7} parent=0 // pred_check_branch
    %11 = sbr.rel (0) target = $region5
  $region4: #{bottleneck_forward.7} parent=0 // pred_region
    _
  $region5: #{bottleneck_forward.7} parent=0 // pred_fallthru
    _
  // Predicated region
  $region6: #{bottleneck_forward.7} parent=0 // pred_check
    _
  $region7: #{bottleneck_forward.7} parent=0 // pred_check_branch
    %13 = sbr.rel (0) target = $region9
  $region8: #{bottleneck_forward.7} parent=0 // pred_region
    _
  $region9: #{bottleneck_forward.7} parent=0 // pred_fallthru
    _
  %v15 = vld [vmem:[%s0] sm:$0xf]
  %v16 = vld [vmem:[%s0 + $0x4] sm:$0xf]
  %v17 = vld [vmem:[%s0 + $0x8] sm:$0xf]
  %v18 = vld [vmem:[%s0 + $0xc] sm:$0xf]
  %v19 = vld [vmem:[%s1] sm:$0xf]
  %v20 = vld [vmem:[%s1 + $0x4] sm:$0xf]
  %v21 = vld [vmem:[%s1 + $0x8] sm:$0xf]
  %v22 = vld [vmem:[%s1 + $0xc] sm:$0xf]
  %v23 = vld [vmem:[%s1 + $0x10] sm:$0xf]
  %v24 = vld [vmem:[%s1 + $0x14] sm:$0xf]
  %v25 = vld [vmem:[%s1 + $0x18] sm:$0xf]
  %v26 = vld [vmem:[%s1 + $0x1c] sm:$0xf]
  %v27 = vld [vmem:[%s1 + $0x20] sm:$0xf]
  %v28 = vld [vmem:[%s1 + $0x24] sm:$0xf]
  %v29 = vld [vmem:[%s1 + $0x28] sm:$0xf]
  %v30 = vld [vmem:[%s1 + $0x2c] sm:$0xf]
  %v31 = vld [vmem:[%s1 + $0x30] sm:$0xf]
  %v32 = vld [vmem:[%s1 + $0x34] sm:$0xf]
  %v33 = vld [vmem:[%s1 + $0x38] sm:$0xf]
  %v34 = vld [vmem:[%s1 + $0x3c] sm:$0xf]
  %s35 = scalar_lea.vmem %s0, 16
  %v36 = vld [vmem:[%s35] sm:$0xf]
  %v37 = vld [vmem:[%s35 + $0x4] sm:$0xf]
  %v38 = vld [vmem:[%s35 + $0x8] sm:$0xf]
  %v39 = vld [vmem:[%s35 + $0xc] sm:$0xf]
  %s40 = scalar_lea.vmem %s1, 64
  %v41 = vld [vmem:[%s40] sm:$0xf]
  %v42 = vld [vmem:[%s40 + $0x4] sm:$0xf]
  %v43 = vld [vmem:[%s40 + $0x8] sm:$0xf]
  %v44 = vld [vmem:[%s40 + $0xc] sm:$0xf]
  %v45 = vld [vmem:[%s40 + $0x10] sm:$0xf]
  %v46 = vld [vmem:[%s40 + $0x14] sm:$0xf]
  %v47 = vld [vmem:[%s40 + $0x18] sm:$0xf]
  %v48 = vld [vmem:[%s40 + $0x1c] sm:$0xf]
  %v49 = vld [vmem:[%s40 + $0x20] sm:$0xf]
  %v50 = vld [vmem:[%s40 + $0x24] sm:$0xf]
  %v51 = vld [vmem:[%s40 + $0x28] sm:$0xf]
  %v52 = vld [vmem:[%s40 + $0x2c] sm:$0xf]
  %v53 = vld [vmem:[%s40 + $0x30] sm:$0xf]
  %v54 = vld [vmem:[%s40 + $0x34] sm:$0xf]
  %v55 = vld [vmem:[%s40 + $0x38] sm:$0xf]
  %v56 = vld [vmem:[%s40 + $0x3c] sm:$0xf]
  %v61 = vunpack.c.l.b16 %v36
  %v62 = vunpack.c.l.b16 %v37
  %v63 = vunpack.c.l.b16 %v38
  %v64 = vunpack.c.l.b16 %v39
  %v65 = vpack.c.b16 %v62, %v61
  %v66 = vpack.c.b16 %v64, %v63
  %v85 = vunpack.c.l.b16 %v41
  %v86 = vunpack.c.l.b16 %v42
  %v87 = vunpack.c.l.b16 %v43
  %v88 = vunpack.c.l.b16 %v44
  %v89 = vunpack.c.l.b16 %v45
  %v90 = vunpack.c.l.b16 %v46
  %v91 = vunpack.c.l.b16 %v47
  %v92 = vunpack.c.l.b16 %v48
  %v93 = vunpack.c.l.b16 %v49
  %v94 = vunpack.c.l.b16 %v50
  %v95 = vunpack.c.l.b16 %v51
  %v96 = vunpack.c.l.b16 %v52
  %v97 = vunpack.c.l.b16 %v53
  %v98 = vunpack.c.l.b16 %v54
  %v99 = vunpack.c.l.b16 %v55
  %v100 = vunpack.c.l.b16 %v56
  %v101 = vpack.c.b16 %v86, %v85
  %v102 = vpack.c.b16 %v88, %v87
  %v103 = vpack.c.b16 %v90, %v89
  %v104 = vpack.c.b16 %v92, %v91
  %v105 = vpack.c.b16 %v94, %v93
  %v106 = vpack.c.b16 %v96, %v95
  %v107 = vpack.c.b16 %v98, %v97
  %v108 = vpack.c.b16 %v100, %v99
  %117 = vmatprep.subr.bf16.mxu0 0
  %118 = vmatpush1.bf16.msra.mxu0 %v101
  %119 = vmatprep.subr.bf16.mxu0 0
  %120 = vmatpush1.bf16.msra.mxu0 %v102
  %121 = vmatprep.subr.bf16.mxu0 0
  %122 = vmatpush1.bf16.msra.mxu0 %v103
  %123 = vmatprep.subr.bf16.mxu0 0
  %124 = vmatpush1.bf16.msra.mxu0 %v104
  %125 = vmatprep.subr.bf16.mxu0 0
  %126 = vmatpush1.bf16.msra.mxu0 %v105
  %127 = vmatprep.subr.bf16.mxu0 0
  %128 = vmatpush1.bf16.msra.mxu0 %v106
  %129 = vmatprep.subr.bf16.mxu0 0
  %130 = vmatpush1.bf16.msra.mxu0 %v107
  %131 = vmatprep.subr.bf16.mxu0 0
  %132 = vmatpush1.bf16.msra.mxu0 %v108
  %133 = vmatprep.subr.bf16.mxu0 0
  %134 = vmatpush1.bf16.msra.mxu0 0
  %135 = vmatprep.subr.bf16.mxu0 0
  %136 = vmatpush1.bf16.msra.mxu0 0
  %137 = vmatprep.subr.bf16.mxu0 0
  %138 = vmatpush1.bf16.msra.mxu0 0
  %139 = vmatprep.subr.bf16.mxu0 0
  %140 = vmatpush1.bf16.msra.mxu0 0
  %141 = vmatprep.subr.bf16.mxu0 0
  %142 = vmatpush1.bf16.msra.mxu0 0
  %143 = vmatprep.subr.bf16.mxu0 0
  %144 = vmatpush1.bf16.msra.mxu0 0
  %145 = vmatprep.subr.bf16.mxu0 0
  %146 = vmatpush1.bf16.msra.mxu0 0
  %147 = vmatprep.subr.bf16.mxu0 0
  %148 = vmatpush1.bf16.msra.mxu0 0
  %149 = vmatprep.mubr.bf16.mxu0 0
  %150 = vmatmul.mubr.bf16.gmra.mrb[0].mxu0 %v65
  %v151 = vpop.f32.mrb[0].mxu0
  %v152 = vadd.f32 0.0, %v151
  %v153 = vpop.f32.mrb[0].mxu0
  %v154 = vpop.f32.mrb[0].mxu0
  %v155 = vadd.f32 0.0, %v154
  %v156 = vpop.f32.mrb[0].mxu0
  %157 = vmatprep.mubr.bf16.mxu0 0
  %158 = vmatmul.mubr.bf16.gmra.mrb[0].mxu0 %v66
  %v159 = vpop.f32.mrb[0].mxu0
  %v160 = vadd.f32 0.0, %v159
  %v161 = vpop.f32.mrb[0].mxu0
  %v162 = vpop.f32.mrb[0].mxu0
  %v163 = vadd.f32 0.0, %v162
  %v164 = vpop.f32.mrb[0].mxu0
  %165 = vdwg.mxu0
  %v170 = vunpack.c.l.b16 %v15
  %v171 = vunpack.c.l.b16 %v16
  %v172 = vunpack.c.l.b16 %v17
  %v173 = vunpack.c.l.b16 %v18
  %v174 = vpack.c.b16 %v171, %v170
  %v175 = vpack.c.b16 %v173, %v172
  %v194 = vunpack.c.l.b16 %v19
  %v195 = vunpack.c.l.b16 %v20
  %v196 = vunpack.c.l.b16 %v21
  %v197 = vunpack.c.l.b16 %v22
  %v198 = vunpack.c.l.b16 %v23
  %v199 = vunpack.c.l.b16 %v24
  %v200 = vunpack.c.l.b16 %v25
  %v201 = vunpack.c.l.b16 %v26
  %v202 = vunpack.c.l.b16 %v27
  %v203 = vunpack.c.l.b16 %v28
  %v204 = vunpack.c.l.b16 %v29
  %v205 = vunpack.c.l.b16 %v30
  %v206 = vunpack.c.l.b16 %v31
  %v207 = vunpack.c.l.b16 %v32
  %v208 = vunpack.c.l.b16 %v33
  %v209 = vunpack.c.l.b16 %v34
  %v210 = vpack.c.b16 %v195, %v194
  %v211 = vpack.c.b16 %v197, %v196
  %v212 = vpack.c.b16 %v199, %v198
  %v213 = vpack.c.b16 %v201, %v200
  %v214 = vpack.c.b16 %v203, %v202
  %v215 = vpack.c.b16 %v205, %v204
  %v216 = vpack.c.b16 %v207, %v206
  %v217 = vpack.c.b16 %v209, %v208
  %226 = vmatprep.subr.bf16.mxu0 0
  %227 = vmatpush1.bf16.msra.mxu0 %v210
  %228 = vmatprep.subr.bf16.mxu0 0
  %229 = vmatpush1.bf16.msra.mxu0 %v211
  %230 = vmatprep.subr.bf16.mxu0 0
  %231 = vmatpush1.bf16.msra.mxu0 %v212
  %232 = vmatprep.subr.bf16.mxu0 0
  %233 = vmatpush1.bf16.msra.mxu0 %v213
  %234 = vmatprep.subr.bf16.mxu0 0
  %235 = vmatpush1.bf16.msra.mxu0 %v214
  %236 = vmatprep.subr.bf16.mxu0 0
  %237 = vmatpush1.bf16.msra.mxu0 %v215
  %238 = vmatprep.subr.bf16.mxu0 0
  %239 = vmatpush1.bf16.msra.mxu0 %v216
  %240 = vmatprep.subr.bf16.mxu0 0
  %241 = vmatpush1.bf16.msra.mxu0 %v217
  %242 = vmatprep.subr.bf16.mxu0 0
  %243 = vmatpush1.bf16.msra.mxu0 0
  %244 = vmatprep.subr.bf16.mxu0 0
  %245 = vmatpush1.bf16.msra.mxu0 0
  %246 = vmatprep.subr.bf16.mxu0 0
  %247 = vmatpush1.bf16.msra.mxu0 0
  %248 = vmatprep.subr.bf16.mxu0 0
  %249 = vmatpush1.bf16.msra.mxu0 0
  %250 = vmatprep.subr.bf16.mxu0 0
  %251 = vmatpush1.bf16.msra.mxu0 0
  %252 = vmatprep.subr.bf16.mxu0 0
  %253 = vmatpush1.bf16.msra.mxu0 0
  %254 = vmatprep.subr.bf16.mxu0 0
  %255 = vmatpush1.bf16.msra.mxu0 0
  %256 = vmatprep.subr.bf16.mxu0 0
  %257 = vmatpush1.bf16.msra.mxu0 0
  %258 = vmatprep.mubr.bf16.mxu0 0
  %259 = vmatmul.mubr.bf16.gmra.mrb[0].mxu0 %v174
  %v260 = vpop.f32.mrb[0].mxu0
  %v261 = vadd.f32 %v152, %v260
  %v262 = vpop.f32.mrb[0].mxu0
  %v263 = vpop.f32.mrb[0].mxu0
  %v264 = vadd.f32 %v155, %v263
  %v265 = vpop.f32.mrb[0].mxu0
  %266 = vmatprep.mubr.bf16.mxu0 0
  %267 = vmatmul.mubr.bf16.gmra.mrb[0].mxu0 %v175
  %v268 = vpop.f32.mrb[0].mxu0
  %v269 = vadd.f32 %v160, %v268
  %v270 = vpop.f32.mrb[0].mxu0
  %v271 = vpop.f32.mrb[0].mxu0
  %v272 = vadd.f32 %v163, %v271
  %v273 = vpop.f32.mrb[0].mxu0
  %274 = vdwg.mxu0
  %s275 = scalar_lea.vmem %s0, 32
  %v276 = vld [vmem:[%s275] sm:$0xf]
  %v277 = vld [vmem:[%s275 + $0x4] sm:$0xf]
  %v278 = vld [vmem:[%s275 + $0x8] sm:$0xf]
  %v279 = vld [vmem:[%s275 + $0xc] sm:$0xf]
  %s280 = scalar_lea.vmem %s1, 128
  %v281 = vld [vmem:[%s280] sm:$0xf]
  %v282 = vld [vmem:[%s280 + $0x4] sm:$0xf]
  %v283 = vld [vmem:[%s280 + $0x8] sm:$0xf]
  %v284 = vld [vmem:[%s280 + $0xc] sm:$0xf]
  %v285 = vld [vmem:[%s280 + $0x10] sm:$0xf]
  %v286 = vld [vmem:[%s280 + $0x14] sm:$0xf]
  %v287 = vld [vmem:[%s280 + $0x18] sm:$0xf]
  %v288 = vld [vmem:[%s280 + $0x1c] sm:$0xf]
  %v289 = vld [vmem:[%s280 + $0x20] sm:$0xf]
  %v290 = vld [vmem:[%s280 + $0x24] sm:$0xf]
  %v291 = vld [vmem:[%s280 + $0x28] sm:$0xf]
  %v292 = vld [vmem:[%s280 + $0x2c] sm:$0xf]
  %v293 = vld [vmem:[%s280 + $0x30] sm:$0xf]
  %v294 = vld [vmem:[%s280 + $0x34] sm:$0xf]
  %v295 = vld [vmem:[%s280 + $0x38] sm:$0xf]
  %v296 = vld [vmem:[%s280 + $0x3c] sm:$0xf]
  %v301 = vunpack.c.l.b16 %v276
  %v302 = vunpack.c.l.b16 %v277
  %v303 = vunpack.c.l.b16 %v278
  %v304 = vunpack.c.l.b16 %v279
  %v305 = vpack.c.b16 %v302, %v301
  %v306 = vpack.c.b16 %v304, %v303
  %v325 = vunpack.c.l.b16 %v281
  %v326 = vunpack.c.l.b16 %v282
  %v327 = vunpack.c.l.b16 %v283
  %v328 = vunpack.c.l.b16 %v284
  %v329 = vunpack.c.l.b16 %v285
  %v330 = vunpack.c.l.b16 %v286
  %v331 = vunpack.c.l.b16 %v287
  %v332 = vunpack.c.l.b16 %v288
  %v333 = vunpack.c.l.b16 %v289
  %v334 = vunpack.c.l.b16 %v290
  %v335 = vunpack.c.l.b16 %v291
  %v336 = vunpack.c.l.b16 %v292
  %v337 = vunpack.c.l.b16 %v293
  %v338 = vunpack.c.l.b16 %v294
  %v339 = vunpack.c.l.b16 %v295
  %v340 = vunpack.c.l.b16 %v296
  %v341 = vpack.c.b16 %v326, %v325
  %v342 = vpack.c.b16 %v328, %v327
  %v343 = vpack.c.b16 %v330, %v329
  %v344 = vpack.c.b16 %v332, %v331
  %v345 = vpack.c.b16 %v334, %v333
  %v346 = vpack.c.b16 %v336, %v335
  %v347 = vpack.c.b16 %v338, %v337
  %v348 = vpack.c.b16 %v340, %v339
  %357 = vmatprep.subr.bf16.mxu0 0
  %358 = vmatpush1.bf16.msra.mxu0 %v341
  %359 = vmatprep.subr.bf16.mxu0 0
  %360 = vmatpush1.bf16.msra.mxu0 %v342
  %361 = vmatprep.subr.bf16.mxu0 0
  %362 = vmatpush1.bf16.msra.mxu0 %v343
  %363 = vmatprep.subr.bf16.mxu0 0
  %364 = vmatpush1.bf16.msra.mxu0 %v344
  %365 = vmatprep.subr.bf16.mxu0 0
  %366 = vmatpush1.bf16.msra.mxu0 %v345
  %367 = vmatprep.subr.bf16.mxu0 0
  %368 = vmatpush1.bf16.msra.mxu0 %v346
  %369 = vmatprep.subr.bf16.mxu0 0
  %370 = vmatpush1.bf16.msra.mxu0 %v347
  %371 = vmatprep.subr.bf16.mxu0 0
  %372 = vmatpush1.bf16.msra.mxu0 %v348
  %373 = vmatprep.subr.bf16.mxu0 0
  %374 = vmatpush1.bf16.msra.mxu0 0
  %375 = vmatprep.subr.bf16.mxu0 0
  %376 = vmatpush1.bf16.msra.mxu0 0
  %377 = vmatprep.subr.bf16.mxu0 0
  %378 = vmatpush1.bf16.msra.mxu0 0
  %379 = vmatprep.subr.bf16.mxu0 0
  %380 = vmatpush1.bf16.msra.mxu0 0
  %381 = vmatprep.subr.bf16.mxu0 0
  %382 = vmatpush1.bf16.msra.mxu0 0
  %383 = vmatprep.subr.bf16.mxu0 0
  %384 = vmatpush1.bf16.msra.mxu0 0
  %385 = vmatprep.subr.bf16.mxu0 0
  %386 = vmatpush1.bf16.msra.mxu0 0
  %387 = vmatprep.subr.bf16.mxu0 0
  %388 = vmatpush1.bf16.msra.mxu0 0
  %389 = vmatprep.mubr.bf16.mxu0 0
  %390 = vmatmul.mubr.bf16.gmra.mrb[0].mxu0 %v305
  %v391 = vpop.f32.mrb[0].mxu0
  %v392 = vadd.f32 0.0, %v391
  %v393 = vpop.f32.mrb[0].mxu0
  %v394 = vpop.f32.mrb[0].mxu0
  %v395 = vadd.f32 0.0, %v394
  %v396 = vpop.f32.mrb[0].mxu0
  %397 = vmatprep.mubr.bf16.mxu0 0
  %398 = vmatmul.mubr.bf16.gmra.mrb[0].mxu0 %v306
  %v399 = vpop.f32.mrb[0].mxu0
  %v400 = vadd.f32 0.0, %v399
  %v401 = vpop.f32.mrb[0].mxu0
  %v402 = vpop.f32.mrb[0].mxu0
  %v403 = vadd.f32 0.0, %v402
  %v404 = vpop.f32.mrb[0].mxu0
  %405 = vdwg.mxu0
  %v406 = vadd.f32 %v261, %v392
  %v407 = vadd.f32 %v264, %v395
  %v408 = vadd.f32 %v269, %v400
  %v409 = vadd.f32 %v272, %v403
  %s410 = scalar_lea.vmem %s0, 48
  %v411 = vld [vmem:[%s410] sm:$0xf]
  %v412 = vld [vmem:[%s410 + $0x4] sm:$0xf]
  %v413 = vld [vmem:[%s410 + $0x8] sm:$0xf]
  %v414 = vld [vmem:[%s410 + $0xc] sm:$0xf]
  %s415 = scalar_lea.vmem %s1, 192
  %v416 = vld [vmem:[%s415] sm:$0xf]
  %v417 = vld [vmem:[%s415 + $0x4] sm:$0xf]
  %v418 = vld [vmem:[%s415 + $0x8] sm:$0xf]
  %v419 = vld [vmem:[%s415 + $0xc] sm:$0xf]
  %v420 = vld [vmem:[%s415 + $0x10] sm:$0xf]
  %v421 = vld [vmem:[%s415 + $0x14] sm:$0xf]
  %v422 = vld [vmem:[%s415 + $0x18] sm:$0xf]
  %v423 = vld [vmem:[%s415 + $0x1c] sm:$0xf]
  %v424 = vld [vmem:[%s415 + $0x20] sm:$0xf]
  %v425 = vld [vmem:[%s415 + $0x24] sm:$0xf]
  %v426 = vld [vmem:[%s415 + $0x28] sm:$0xf]
  %v427 = vld [vmem:[%s415 + $0x2c] sm:$0xf]
  %v428 = vld [vmem:[%s415 + $0x30] sm:$0xf]
  %v429 = vld [vmem:[%s415 + $0x34] sm:$0xf]
  %v430 = vld [vmem:[%s415 + $0x38] sm:$0xf]
  %v431 = vld [vmem:[%s415 + $0x3c] sm:$0xf]
  %v436 = vunpack.c.l.b16 %v411
  %v437 = vunpack.c.l.b16 %v412
  %v438 = vunpack.c.l.b16 %v413
  %v439 = vunpack.c.l.b16 %v414
  %v440 = vpack.c.b16 %v437, %v436
  %v441 = vpack.c.b16 %v439, %v438
  %v460 = vunpack.c.l.b16 %v416
  %v461 = vunpack.c.l.b16 %v417
  %v462 = vunpack.c.l.b16 %v418
  %v463 = vunpack.c.l.b16 %v419
  %v464 = vunpack.c.l.b16 %v420
  %v465 = vunpack.c.l.b16 %v421
  %v466 = vunpack.c.l.b16 %v422
  %v467 = vunpack.c.l.b16 %v423
  %v468 = vunpack.c.l.b16 %v424
  %v469 = vunpack.c.l.b16 %v425
  %v470 = vunpack.c.l.b16 %v426
  %v471 = vunpack.c.l.b16 %v427
  %v472 = vunpack.c.l.b16 %v428
  %v473 = vunpack.c.l.b16 %v429
  %v474 = vunpack.c.l.b16 %v430
  %v475 = vunpack.c.l.b16 %v431
  %v476 = vpack.c.b16 %v461, %v460
  %v477 = vpack.c.b16 %v463, %v462
  %v478 = vpack.c.b16 %v465, %v464
  %v479 = vpack.c.b16 %v467, %v466
  %v480 = vpack.c.b16 %v469, %v468
  %v481 = vpack.c.b16 %v471, %v470
  %v482 = vpack.c.b16 %v473, %v472
  %v483 = vpack.c.b16 %v475, %v474
  %492 = vmatprep.subr.bf16.mxu0 0
  %493 = vmatpush1.bf16.msra.mxu0 %v476
  %494 = vmatprep.subr.bf16.mxu0 0
  %495 = vmatpush1.bf16.msra.mxu0 %v477
  %496 = vmatprep.subr.bf16.mxu0 0
  %497 = vmatpush1.bf16.msra.mxu0 %v478
  %498 = vmatprep.subr.bf16.mxu0 0
  %499 = vmatpush1.bf16.msra.mxu0 %v479
  %500 = vmatprep.subr.bf16.mxu0 0
  %501 = vmatpush1.bf16.msra.mxu0 %v480
  %502 = vmatprep.subr.bf16.mxu0 0
  %503 = vmatpush1.bf16.msra.mxu0 %v481
  %504 = vmatprep.subr.bf16.mxu0 0
  %505 = vmatpush1.bf16.msra.mxu0 %v482
  %506 = vmatprep.subr.bf16.mxu0 0
  %507 = vmatpush1.bf16.msra.mxu0 %v483
  %508 = vmatprep.subr.bf16.mxu0 0
  %509 = vmatpush1.bf16.msra.mxu0 0
  %510 = vmatprep.subr.bf16.mxu0 0
  %511 = vmatpush1.bf16.msra.mxu0 0
  %512 = vmatprep.subr.bf16.mxu0 0
  %513 = vmatpush1.bf16.msra.mxu0 0
  %514 = vmatprep.subr.bf16.mxu0 0
  %515 = vmatpush1.bf16.msra.mxu0 0
  %516 = vmatprep.subr.bf16.mxu0 0
  %517 = vmatpush1.bf16.msra.mxu0 0
  %518 = vmatprep.subr.bf16.mxu0 0
  %519 = vmatpush1.bf16.msra.mxu0 0
  %520 = vmatprep.subr.bf16.mxu0 0
  %521 = vmatpush1.bf16.msra.mxu0 0
  %522 = vmatprep.subr.bf16.mxu0 0
  %523 = vmatpush1.bf16.msra.mxu0 0
  %524 = vmatprep.mubr.bf16.mxu0 0
  %525 = vmatmul.mubr.bf16.gmra.mrb[0].mxu0 %v440
  %v526 = vpop.f32.mrb[0].mxu0
  %v527 = vadd.f32 0.0, %v526
  %v528 = vpop.f32.mrb[0].mxu0
  %v529 = vpop.f32.mrb[0].mxu0
  %v530 = vadd.f32 0.0, %v529
  %v531 = vpop.f32.mrb[0].mxu0
  %532 = vmatprep.mubr.bf16.mxu0 0
  %533 = vmatmul.mubr.bf16.gmra.mrb[0].mxu0 %v441
  %v534 = vpop.f32.mrb[0].mxu0
  %v535 = vadd.f32 0.0, %v534
  %v536 = vpop.f32.mrb[0].mxu0
  %v537 = vpop.f32.mrb[0].mxu0
  %v538 = vadd.f32 0.0, %v537
  %v539 = vpop.f32.mrb[0].mxu0
  %540 = vdwg.mxu0
  %v541 = vadd.f32 %v406, %v527
  %v542 = vadd.f32 %v407, %v530
  %v543 = vadd.f32 %v408, %v535
  %v544 = vadd.f32 %v409, %v538
  %s545 = scalar_lea.vmem %s0, 64
  %v546 = vld [vmem:[%s545] sm:$0xf]
  %v547 = vld [vmem:[%s545 + $0x4] sm:$0xf]
  %v548 = vld [vmem:[%s545 + $0x8] sm:$0xf]
  %v549 = vld [vmem:[%s545 + $0xc] sm:$0xf]
  %s550 = scalar_lea.vmem %s1, 256
  %v551 = vld [vmem:[%s550] sm:$0xf]
  %v552 = vld [vmem:[%s550 + $0x4] sm:$0xf]
  %v553 = vld [vmem:[%s550 + $0x8] sm:$0xf]
  %v554 = vld [vmem:[%s550 + $0xc] sm:$0xf]
  %v555 = vld [vmem:[%s550 + $0x10] sm:$0xf]
  %v556 = vld [vmem:[%s550 + $0x14] sm:$0xf]
  %v557 = vld [vmem:[%s550 + $0x18] sm:$0xf]
  %v558 = vld [vmem:[%s550 + $0x1c] sm:$0xf]
  %v559 = vld [vmem:[%s550 + $0x20] sm:$0xf]
  %v560 = vld [vmem:[%s550 + $0x24] sm:$0xf]
  %v561 = vld [vmem:[%s550 + $0x28] sm:$0xf]
  %v562 = vld [vmem:[%s550 + $0x2c] sm:$0xf]
  %v563 = vld [vmem:[%s550 + $0x30] sm:$0xf]
  %v564 = vld [vmem:[%s550 + $0x34] sm:$0xf]
  %v565 = vld [vmem:[%s550 + $0x38] sm:$0xf]
  %v566 = vld [vmem:[%s550 + $0x3c] sm:$0xf]
  %v571 = vunpack.c.l.b16 %v546
  %v572 = vunpack.c.l.b16 %v547
  %v573 = vunpack.c.l.b16 %v548
  %v574 = vunpack.c.l.b16 %v549
  %v575 = vpack.c.b16 %v572, %v571
  %v576 = vpack.c.b16 %v574, %v573
  %v595 = vunpack.c.l.b16 %v551
  %v596 = vunpack.c.l.b16 %v552
  %v597 = vunpack.c.l.b16 %v553
  %v598 = vunpack.c.l.b16 %v554
  %v599 = vunpack.c.l.b16 %v555
  %v600 = vunpack.c.l.b16 %v556
  %v601 = vunpack.c.l.b16 %v557
  %v602 = vunpack.c.l.b16 %v558
  %v603 = vunpack.c.l.b16 %v559
  %v604 = vunpack.c.l.b16 %v560
  %v605 = vunpack.c.l.b16 %v561
  %v606 = vunpack.c.l.b16 %v562
  %v607 = vunpack.c.l.b16 %v563
  %v608 = vunpack.c.l.b16 %v564
  %v609 = vunpack.c.l.b16 %v565
  %v610 = vunpack.c.l.b16 %v566
  %v611 = vpack.c.b16 %v596, %v595
  %v612 = vpack.c.b16 %v598, %v597
  %v613 = vpack.c.b16 %v600, %v599
  %v614 = vpack.c.b16 %v602, %v601
  %v615 = vpack.c.b16 %v604, %v603
  %v616 = vpack.c.b16 %v606, %v605
  %v617 = vpack.c.b16 %v608, %v607
  %v618 = vpack.c.b16 %v610, %v609
  %627 = vmatprep.subr.bf16.mxu0 0
  %628 = vmatpush1.bf16.msra.mxu0 %v611
  %629 = vmatprep.subr.bf16.mxu0 0
  %630 = vmatpush1.bf16.msra.mxu0 %v612
  %631 = vmatprep.subr.bf16.mxu0 0
  %632 = vmatpush1.bf16.msra.mxu0 %v613
  %633 = vmatprep.subr.bf16.mxu0 0
  %634 = vmatpush1.bf16.msra.mxu0 %v614
  %635 = vmatprep.subr.bf16.mxu0 0
  %636 = vmatpush1.bf16.msra.mxu0 %v615
  %637 = vmatprep.subr.bf16.mxu0 0
  %638 = vmatpush1.bf16.msra.mxu0 %v616
  %639 = vmatprep.subr.bf16.mxu0 0
  %640 = vmatpush1.bf16.msra.mxu0 %v617
  %641 = vmatprep.subr.bf16.mxu0 0
  %642 = vmatpush1.bf16.msra.mxu0 %v618
  %643 = vmatprep.subr.bf16.mxu0 0
  %644 = vmatpush1.bf16.msra.mxu0 0
  %645 = vmatprep.subr.bf16.mxu0 0
  %646 = vmatpush1.bf16.msra.mxu0 0
  %647 = vmatprep.subr.bf16.mxu0 0
  %648 = vmatpush1.bf16.msra.mxu0 0
  %649 = vmatprep.subr.bf16.mxu0 0
  %650 = vmatpush1.bf16.msra.mxu0 0
  %651 = vmatprep.subr.bf16.mxu0 0
  %652 = vmatpush1.bf16.msra.mxu0 0
  %653 = vmatprep.subr.bf16.mxu0 0
  %654 = vmatpush1.bf16.msra.mxu0 0
  %655 = vmatprep.subr.bf16.mxu0 0
  %656 = vmatpush1.bf16.msra.mxu0 0
  %657 = vmatprep.subr.bf16.mxu0 0
  %658 = vmatpush1.bf16.msra.mxu0 0
  %659 = vmatprep.mubr.bf16.mxu0 0
  %660 = vmatmul.mubr.bf16.gmra.mrb[0].mxu0 %v575
  %v661 = vpop.f32.mrb[0].mxu0
  %v662 = vadd.f32 0.0, %v661
  %v663 = vpop.f32.mrb[0].mxu0
  %v664 = vpop.f32.mrb[0].mxu0
  %v665 = vadd.f32 0.0, %v664
  %v666 = vpop.f32.mrb[0].mxu0
  %667 = vmatprep.mubr.bf16.mxu0 0
  %668 = vmatmul.mubr.bf16.gmra.mrb[0].mxu0 %v576
  %v669 = vpop.f32.mrb[0].mxu0
  %v670 = vadd.f32 0.0, %v669
  %v671 = vpop.f32.mrb[0].mxu0
  %v672 = vpop.f32.mrb[0].mxu0
  %v673 = vadd.f32 0.0, %v672
  %v674 = vpop.f32.mrb[0].mxu0
  %675 = vdwg.mxu0
  %v676 = vadd.f32 %v541, %v662
  %v677 = vadd.f32 %v542, %v665
  %v678 = vadd.f32 %v543, %v670
  %v679 = vadd.f32 %v544, %v673
  %s680 = scalar_lea.vmem %s0, 80
  %v681 = vld [vmem:[%s680] sm:$0xf]
  %v682 = vld [vmem:[%s680 + $0x4] sm:$0xf]
  %v683 = vld [vmem:[%s680 + $0x8] sm:$0xf]
  %v684 = vld [vmem:[%s680 + $0xc] sm:$0xf]
  %s685 = scalar_lea.vmem %s1, 320
  %v686 = vld [vmem:[%s685] sm:$0xf]
  %v687 = vld [vmem:[%s685 + $0x4] sm:$0xf]
  %v688 = vld [vmem:[%s685 + $0x8] sm:$0xf]
  %v689 = vld [vmem:[%s685 + $0xc] sm:$0xf]
  %v690 = vld [vmem:[%s685 + $0x10] sm:$0xf]
  %v691 = vld [vmem:[%s685 + $0x14] sm:$0xf]
  %v692 = vld [vmem:[%s685 + $0x18] sm:$0xf]
  %v693 = vld [vmem:[%s685 + $0x1c] sm:$0xf]
  %v694 = vld [vmem:[%s685 + $0x20] sm:$0xf]
  %v695 = vld [vmem:[%s685 + $0x24] sm:$0xf]
  %v696 = vld [vmem:[%s685 + $0x28] sm:$0xf]
  %v697 = vld [vmem:[%s685 + $0x2c] sm:$0xf]
  %v698 = vld [vmem:[%s685 + $0x30] sm:$0xf]
  %v699 = vld [vmem:[%s685 + $0x34] sm:$0xf]
  %v700 = vld [vmem:[%s685 + $0x38] sm:$0xf]
  %v701 = vld [vmem:[%s685 + $0x3c] sm:$0xf]
  %v706 = vunpack.c.l.b16 %v681
  %v707 = vunpack.c.l.b16 %v682
  %v708 = vunpack.c.l.b16 %v683
  %v709 = vunpack.c.l.b16 %v684
  %v710 = vpack.c.b16 %v707, %v706
  %v711 = vpack.c.b16 %v709, %v708
  %v730 = vunpack.c.l.b16 %v686
  %v731 = vunpack.c.l.b16 %v687
  %v732 = vunpack.c.l.b16 %v688
  %v733 = vunpack.c.l.b16 %v689
  %v734 = vunpack.c.l.b16 %v690
  %v735 = vunpack.c.l.b16 %v691
  %v736 = vunpack.c.l.b16 %v692
  %v737 = vunpack.c.l.b16 %v693
  %v738 = vunpack.c.l.b16 %v694
  %v739 = vunpack.c.l.b16 %v695
  %v740 = vunpack.c.l.b16 %v696
  %v741 = vunpack.c.l.b16 %v697
  %v742 = vunpack.c.l.b16 %v698
  %v743 = vunpack.c.l.b16 %v699
  %v744 = vunpack.c.l.b16 %v700
  %v745 = vunpack.c.l.b16 %v701
  %v746 = vpack.c.b16 %v731, %v730
  %v747 = vpack.c.b16 %v733, %v732
  %v748 = vpack.c.b16 %v735, %v734
  %v749 = vpack.c.b16 %v737, %v736
  %v750 = vpack.c.b16 %v739, %v738
  %v751 = vpack.c.b16 %v741, %v740
  %v752 = vpack.c.b16 %v743, %v742
  %v753 = vpack.c.b16 %v745, %v744
  %762 = vmatprep.subr.bf16.mxu0 0
  %763 = vmatpush1.bf16.msra.mxu0 %v746
  %764 = vmatprep.subr.bf16.mxu0 0
  %765 = vmatpush1.bf16.msra.mxu0 %v747
  %766 = vmatprep.subr.bf16.mxu0 0
  %767 = vmatpush1.bf16.msra.mxu0 %v748
  %768 = vmatprep.subr.bf16.mxu0 0
  %769 = vmatpush1.bf16.msra.mxu0 %v749
  %770 = vmatprep.subr.bf16.mxu0 0
  %771 = vmatpush1.bf16.msra.mxu0 %v750
  %772 = vmatprep.subr.bf16.mxu0 0
  %773 = vmatpush1.bf16.msra.mxu0 %v751
  %774 = vmatprep.subr.bf16.mxu0 0
  %775 = vmatpush1.bf16.msra.mxu0 %v752
  %776 = vmatprep.subr.bf16.mxu0 0
  %777 = vmatpush1.bf16.msra.mxu0 %v753
  %778 = vmatprep.subr.bf16.mxu0 0
  %779 = vmatpush1.bf16.msra.mxu0 0
  %780 = vmatprep.subr.bf16.mxu0 0
  %781 = vmatpush1.bf16.msra.mxu0 0
  %782 = vmatprep.subr.bf16.mxu0 0
  %783 = vmatpush1.bf16.msra.mxu0 0
  %784 = vmatprep.subr.bf16.mxu0 0
  %785 = vmatpush1.bf16.msra.mxu0 0
  %786 = vmatprep.subr.bf16.mxu0 0
  %787 = vmatpush1.bf16.msra.mxu0 0
  %788 = vmatprep.subr.bf16.mxu0 0
  %789 = vmatpush1.bf16.msra.mxu0 0
  %790 = vmatprep.subr.bf16.mxu0 0
  %791 = vmatpush1.bf16.msra.mxu0 0
  %792 = vmatprep.subr.bf16.mxu0 0
  %793 = vmatpush1.bf16.msra.mxu0 0
  %794 = vmatprep.mubr.bf16.mxu0 0
  %795 = vmatmul.mubr.bf16.gmra.mrb[0].mxu0 %v710
  %v796 = vpop.f32.mrb[0].mxu0
  %v797 = vadd.f32 0.0, %v796
  %v798 = vpop.f32.mrb[0].mxu0
  %v799 = vpop.f32.mrb[0].mxu0
  %v800 = vadd.f32 0.0, %v799
  %v801 = vpop.f32.mrb[0].mxu0
  %802 = vmatprep.mubr.bf16.mxu0 0
  %803 = vmatmul.mubr.bf16.gmra.mrb[0].mxu0 %v711
  %v804 = vpop.f32.mrb[0].mxu0
  %v805 = vadd.f32 0.0, %v804
  %v806 = vpop.f32.mrb[0].mxu0
  %v807 = vpop.f32.mrb[0].mxu0
  %v808 = vadd.f32 0.0, %v807
  %v809 = vpop.f32.mrb[0].mxu0
  %810 = vdwg.mxu0
  %v811 = vadd.f32 %v676, %v797
  %v812 = vadd.f32 %v677, %v800
  %v813 = vadd.f32 %v678, %v805
  %v814 = vadd.f32 %v679, %v808
  %s815 = scalar_lea.vmem %s0, 96
  %v816 = vld [vmem:[%s815] sm:$0xf]
  %v817 = vld [vmem:[%s815 + $0x4] sm:$0xf]
  %v818 = vld [vmem:[%s815 + $0x8] sm:$0xf]
  %v819 = vld [vmem:[%s815 + $0xc] sm:$0xf]
  %s820 = scalar_lea.vmem %s1, 384
  %v821 = vld [vmem:[%s820] sm:$0xf]
  %v822 = vld [vmem:[%s820 + $0x4] sm:$0xf]
  %v823 = vld [vmem:[%s820 + $0x8] sm:$0xf]
  %v824 = vld [vmem:[%s820 + $0xc] sm:$0xf]
  %v825 = vld [vmem:[%s820 + $0x10] sm:$0xf]
  %v826 = vld [vmem:[%s820 + $0x14] sm:$0xf]
  %v827 = vld [vmem:[%s820 + $0x18] sm:$0xf]
  %v828 = vld [vmem:[%s820 + $0x1c] sm:$0xf]
  %v829 = vld [vmem:[%s820 + $0x20] sm:$0xf]
  %v830 = vld [vmem:[%s820 + $0x24] sm:$0xf]
  %v831 = vld [vmem:[%s820 + $0x28] sm:$0xf]
  %v832 = vld [vmem:[%s820 + $0x2c] sm:$0xf]
  %v833 = vld [vmem:[%s820 + $0x30] sm:$0xf]
  %v834 = vld [vmem:[%s820 + $0x34] sm:$0xf]
  %v835 = vld [vmem:[%s820 + $0x38] sm:$0xf]
  %v836 = vld [vmem:[%s820 + $0x3c] sm:$0xf]
  %v841 = vunpack.c.l.b16 %v816
  %v842 = vunpack.c.l.b16 %v817
  %v843 = vunpack.c.l.b16 %v818
  %v844 = vunpack.c.l.b16 %v819
  %v845 = vpack.c.b16 %v842, %v841
  %v846 = vpack.c.b16 %v844, %v843
  %v865 = vunpack.c.l.b16 %v821
  %v866 = vunpack.c.l.b16 %v822
  %v867 = vunpack.c.l.b16 %v823
  %v868 = vunpack.c.l.b16 %v824
  %v869 = vunpack.c.l.b16 %v825
  %v870 = vunpack.c.l.b16 %v826
  %v871 = vunpack.c.l.b16 %v827
  %v872 = vunpack.c.l.b16 %v828
  %v873 = vunpack.c.l.b16 %v829
  %v874 = vunpack.c.l.b16 %v830
  %v875 = vunpack.c.l.b16 %v831
  %v876 = vunpack.c.l.b16 %v832
  %v877 = vunpack.c.l.b16 %v833
  %v878 = vunpack.c.l.b16 %v834
  %v879 = vunpack.c.l.b16 %v835
  %v880 = vunpack.c.l.b16 %v836
  %v881 = vpack.c.b16 %v866, %v865
  %v882 = vpack.c.b16 %v868, %v867
  %v883 = vpack.c.b16 %v870, %v869
  %v884 = vpack.c.b16 %v872, %v871
  %v885 = vpack.c.b16 %v874, %v873
  %v886 = vpack.c.b16 %v876, %v875
  %v887 = vpack.c.b16 %v878, %v877
  %v888 = vpack.c.b16 %v880, %v879
  %897 = vmatprep.subr.bf16.mxu0 0
  %898 = vmatpush1.bf16.msra.mxu0 %v881
  %899 = vmatprep.subr.bf16.mxu0 0
  %900 = vmatpush1.bf16.msra.mxu0 %v882
  %901 = vmatprep.subr.bf16.mxu0 0
  %902 = vmatpush1.bf16.msra.mxu0 %v883
  %903 = vmatprep.subr.bf16.mxu0 0
  %904 = vmatpush1.bf16.msra.mxu0 %v884
  %905 = vmatprep.subr.bf16.mxu0 0
  %906 = vmatpush1.bf16.msra.mxu0 %v885
  %907 = vmatprep.subr.bf16.mxu0 0
  %908 = vmatpush1.bf16.msra.mxu0 %v886
  %909 = vmatprep.subr.bf16.mxu0 0
  %910 = vmatpush1.bf16.msra.mxu0 %v887
  %911 = vmatprep.subr.bf16.mxu0 0
  %912 = vmatpush1.bf16.msra.mxu0 %v888
  %913 = vmatprep.subr.bf16.mxu0 0
  %914 = vmatpush1.bf16.msra.mxu0 0
  %915 = vmatprep.subr.bf16.mxu0 0
  %916 = vmatpush1.bf16.msra.mxu0 0
  %917 = vmatprep.subr.bf16.mxu0 0
  %918 = vmatpush1.bf16.msra.mxu0 0
  %919 = vmatprep.subr.bf16.mxu0 0
  %920 = vmatpush1.bf16.msra.mxu0 0
  %921 = vmatprep.subr.bf16.mxu0 0
  %922 = vmatpush1.bf16.msra.mxu0 0
  %923 = vmatprep.subr.bf16.mxu0 0
  %924 = vmatpush1.bf16.msra.mxu0 0
  %925 = vmatprep.subr.bf16.mxu0 0
  %926 = vmatpush1.bf16.msra.mxu0 0
  %927 = vmatprep.subr.bf16.mxu0 0
  %928 = vmatpush1.bf16.msra.mxu0 0
  %929 = vmatprep.mubr.bf16.mxu0 0
  %930 = vmatmul.mubr.bf16.gmra.mrb[0].mxu0 %v845
  %v931 = vpop.f32.mrb[0].mxu0
  %v932 = vadd.f32 0.0, %v931
  %v933 = vpop.f32.mrb[0].mxu0
  %v934 = vpop.f32.mrb[0].mxu0
  %v935 = vadd.f32 0.0, %v934
  %v936 = vpop.f32.mrb[0].mxu0
  %937 = vmatprep.mubr.bf16.mxu0 0
  %938 = vmatmul.mubr.bf16.gmra.mrb[0].mxu0 %v846
  %v939 = vpop.f32.mrb[0].mxu0
  %v940 = vadd.f32 0.0, %v939
  %v941 = vpop.f32.mrb[0].mxu0
  %v942 = vpop.f32.mrb[0].mxu0
  %v943 = vadd.f32 0.0, %v942
  %v944 = vpop.f32.mrb[0].mxu0
  %945 = vdwg.mxu0
  %v946 = vadd.f32 %v811, %v932
  %v947 = vadd.f32 %v812, %v935
  %v948 = vadd.f32 %v813, %v940
  %v949 = vadd.f32 %v814, %v943
  %s950 = scalar_lea.vmem %s0, 112
  %v951 = vld [vmem:[%s950] sm:$0xf]
  %v952 = vld [vmem:[%s950 + $0x4] sm:$0xf]
  %v953 = vld [vmem:[%s950 + $0x8] sm:$0xf]
  %v954 = vld [vmem:[%s950 + $0xc] sm:$0xf]
  %s955 = scalar_lea.vmem %s1, 448
  %v956 = vld [vmem:[%s955] sm:$0xf]
  %v957 = vld [vmem:[%s955 + $0x4] sm:$0xf]
  %v958 = vld [vmem:[%s955 + $0x8] sm:$0xf]
  %v959 = vld [vmem:[%s955 + $0xc] sm:$0xf]
  %v960 = vld [vmem:[%s955 + $0x10] sm:$0xf]
  %v961 = vld [vmem:[%s955 + $0x14] sm:$0xf]
  %v962 = vld [vmem:[%s955 + $0x18] sm:$0xf]
  %v963 = vld [vmem:[%s955 + $0x1c] sm:$0xf]
  %v964 = vld [vmem:[%s955 + $0x20] sm:$0xf]
  %v965 = vld [vmem:[%s955 + $0x24] sm:$0xf]
  %v966 = vld [vmem:[%s955 + $0x28] sm:$0xf]
  %v967 = vld [vmem:[%s955 + $0x2c] sm:$0xf]
  %v968 = vld [vmem:[%s955 + $0x30] sm:$0xf]
  %v969 = vld [vmem:[%s955 + $0x34] sm:$0xf]
  %v970 = vld [vmem:[%s955 + $0x38] sm:$0xf]
  %v971 = vld [vmem:[%s955 + $0x3c] sm:$0xf]
  %v976 = vunpack.c.l.b16 %v951
  %v977 = vunpack.c.l.b16 %v952
  %v978 = vunpack.c.l.b16 %v953
  %v979 = vunpack.c.l.b16 %v954
  %v980 = vpack.c.b16 %v977, %v976
  %v981 = vpack.c.b16 %v979, %v978
  %v1000 = vunpack.c.l.b16 %v956
  %v1001 = vunpack.c.l.b16 %v957
  %v1002 = vunpack.c.l.b16 %v958
  %v1003 = vunpack.c.l.b16 %v959
  %v1004 = vunpack.c.l.b16 %v960
  %v1005 = vunpack.c.l.b16 %v961
  %v1006 = vunpack.c.l.b16 %v962
  %v1007 = vunpack.c.l.b16 %v963
  %v1008 = vunpack.c.l.b16 %v964
  %v1009 = vunpack.c.l.b16 %v965
  %v1010 = vunpack.c.l.b16 %v966
  %v1011 = vunpack.c.l.b16 %v967
  %v1012 = vunpack.c.l.b16 %v968
  %v1013 = vunpack.c.l.b16 %v969
  %v1014 = vunpack.c.l.b16 %v970
  %v1015 = vunpack.c.l.b16 %v971
  %v1016 = vpack.c.b16 %v1001, %v1000
  %v1017 = vpack.c.b16 %v1003, %v1002
  %v1018 = vpack.c.b16 %v1005, %v1004
  %v1019 = vpack.c.b16 %v1007, %v1006
  %v1020 = vpack.c.b16 %v1009, %v1008
  %v1021 = vpack.c.b16 %v1011, %v1010
  %v1022 = vpack.c.b16 %v1013, %v1012
  %v1023 = vpack.c.b16 %v1015, %v1014
  %1032 = vmatprep.subr.bf16.mxu0 0
  %1033 = vmatpush1.bf16.msra.mxu0 %v1016
  %1034 = vmatprep.subr.bf16.mxu0 0
  %1035 = vmatpush1.bf16.msra.mxu0 %v1017
  %1036 = vmatprep.subr.bf16.mxu0 0
  %1037 = vmatpush1.bf16.msra.mxu0 %v1018
  %1038 = vmatprep.subr.bf16.mxu0 0
  %1039 = vmatpush1.bf16.msra.mxu0 %v1019
  %1040 = vmatprep.subr.bf16.mxu0 0
  %1041 = vmatpush1.bf16.msra.mxu0 %v1020
  %1042 = vmatprep.subr.bf16.mxu0 0
  %1043 = vmatpush1.bf16.msra.mxu0 %v1021
  %1044 = vmatprep.subr.bf16.mxu0 0
  %1045 = vmatpush1.bf16.msra.mxu0 %v1022
  %1046 = vmatprep.subr.bf16.mxu0 0
  %1047 = vmatpush1.bf16.msra.mxu0 %v1023
  %1048 = vmatprep.subr.bf16.mxu0 0
  %1049 = vmatpush1.bf16.msra.mxu0 0
  %1050 = vmatprep.subr.bf16.mxu0 0
  %1051 = vmatpush1.bf16.msra.mxu0 0
  %1052 = vmatprep.subr.bf16.mxu0 0
  %1053 = vmatpush1.bf16.msra.mxu0 0
  %1054 = vmatprep.subr.bf16.mxu0 0
  %1055 = vmatpush1.bf16.msra.mxu0 0
  %1056 = vmatprep.subr.bf16.mxu0 0
  %1057 = vmatpush1.bf16.msra.mxu0 0
  %1058 = vmatprep.subr.bf16.mxu0 0
  %1059 = vmatpush1.bf16.msra.mxu0 0
  %1060 = vmatprep.subr.bf16.mxu0 0
  %1061 = vmatpush1.bf16.msra.mxu0 0
  %1062 = vmatprep.subr.bf16.mxu0 0
  %1063 = vmatpush1.bf16.msra.mxu0 0
  %1064 = vmatprep.mubr.bf16.mxu0 0
  %1065 = vmatmul.mubr.bf16.gmra.mrb[0].mxu0 %v980
  %v1066 = vpop.f32.mrb[0].mxu0
  %v1067 = vadd.f32 0.0, %v1066
  %v1068 = vpop.f32.mrb[0].mxu0
  %v1069 = vpop.f32.mrb[0].mxu0
  %v1070 = vadd.f32 0.0, %v1069
  %v1071 = vpop.f32.mrb[0].mxu0
  %1072 = vmatprep.mubr.bf16.mxu0 0
  %1073 = vmatmul.mubr.bf16.gmra.mrb[0].mxu0 %v981
  %v1074 = vpop.f32.mrb[0].mxu0
  %v1075 = vadd.f32 0.0, %v1074
  %v1076 = vpop.f32.mrb[0].mxu0
  %v1077 = vpop.f32.mrb[0].mxu0
  %v1078 = vadd.f32 0.0, %v1077
  %v1079 = vpop.f32.mrb[0].mxu0
  %1080 = vdwg.mxu0
  %v1081 = vadd.f32 %v946, %v1067
  %v1082 = vadd.f32 %v947, %v1070
  %v1083 = vadd.f32 %v948, %v1075
  %v1084 = vadd.f32 %v949, %v1078
  %s1085 = scalar_lea.vmem %s0, 128
  %v1086 = vld [vmem:[%s1085] sm:$0xf]
  %v1087 = vld [vmem:[%s1085 + $0x4] sm:$0xf]
  %v1088 = vld [vmem:[%s1085 + $0x8] sm:$0xf]
  %v1089 = vld [vmem:[%s1085 + $0xc] sm:$0xf]
  %s1090 = scalar_lea.vmem %s1, 512
  %v1091 = vld [vmem:[%s1090] sm:$0xf]
  %v1092 = vld [vmem:[%s1090 + $0x4] sm:$0xf]
  %v1093 = vld [vmem:[%s1090 + $0x8] sm:$0xf]
  %v1094 = vld [vmem:[%s1090 + $0xc] sm:$0xf]
  %v1095 = vld [vmem:[%s1090 + $0x10] sm:$0xf]
  %v1096 = vld [vmem:[%s1090 + $0x14] sm:$0xf]
  %v1097 = vld [vmem:[%s1090 + $0x18] sm:$0xf]
  %v1098 = vld [vmem:[%s1090 + $0x1c] sm:$0xf]
  %v1099 = vld [vmem:[%s1090 + $0x20] sm:$0xf]
  %v1100 = vld [vmem:[%s1090 + $0x24] sm:$0xf]
  %v1101 = vld [vmem:[%s1090 + $0x28] sm:$0xf]
  %v1102 = vld [vmem:[%s1090 + $0x2c] sm:$0xf]
  %v1103 = vld [vmem:[%s1090 + $0x30] sm:$0xf]
  %v1104 = vld [vmem:[%s1090 + $0x34] sm:$0xf]
  %v1105 = vld [vmem:[%s1090 + $0x38] sm:$0xf]
  %v1106 = vld [vmem:[%s1090 + $0x3c] sm:$0xf]
  %v1111 = vunpack.c.l.b16 %v1086
  %v1112 = vunpack.c.l.b16 %v1087
  %v1113 = vunpack.c.l.b16 %v1088
  %v1114 = vunpack.c.l.b16 %v1089
  %v1115 = vpack.c.b16 %v1112, %v1111
  %v1116 = vpack.c.b16 %v1114, %v1113
  %v1135 = vunpack.c.l.b16 %v1091
  %v1136 = vunpack.c.l.b16 %v1092
  %v1137 = vunpack.c.l.b16 %v1093
  %v1138 = vunpack.c.l.b16 %v1094
  %v1139 = vunpack.c.l.b16 %v1095
  %v1140 = vunpack.c.l.b16 %v1096
  %v1141 = vunpack.c.l.b16 %v1097
  %v1142 = vunpack.c.l.b16 %v1098
  %v1143 = vunpack.c.l.b16 %v1099
  %v1144 = vunpack.c.l.b16 %v1100
  %v1145 = vunpack.c.l.b16 %v1101
  %v1146 = vunpack.c.l.b16 %v1102
  %v1147 = vunpack.c.l.b16 %v1103
  %v1148 = vunpack.c.l.b16 %v1104
  %v1149 = vunpack.c.l.b16 %v1105
  %v1150 = vunpack.c.l.b16 %v1106
  %v1151 = vpack.c.b16 %v1136, %v1135
  %v1152 = vpack.c.b16 %v1138, %v1137
  %v1153 = vpack.c.b16 %v1140, %v1139
  %v1154 = vpack.c.b16 %v1142, %v1141
  %v1155 = vpack.c.b16 %v1144, %v1143
  %v1156 = vpack.c.b16 %v1146, %v1145
  %v1157 = vpack.c.b16 %v1148, %v1147
  %v1158 = vpack.c.b16 %v1150, %v1149
  %1167 = vmatprep.subr.bf16.mxu0 0
  %1168 = vmatpush1.bf16.msra.mxu0 %v1151
  %1169 = vmatprep.subr.bf16.mxu0 0
  %1170 = vmatpush1.bf16.msra.mxu0 %v1152
  %1171 = vmatprep.subr.bf16.mxu0 0
  %1172 = vmatpush1.bf16.msra.mxu0 %v1153
  %1173 = vmatprep.subr.bf16.mxu0 0
  %1174 = vmatpush1.bf16.msra.mxu0 %v1154
  %1175 = vmatprep.subr.bf16.mxu0 0
  %1176 = vmatpush1.bf16.msra.mxu0 %v1155
  %1177 = vmatprep.subr.bf16.mxu0 0
  %1178 = vmatpush1.bf16.msra.mxu0 %v1156
  %1179 = vmatprep.subr.bf16.mxu0 0
  %1180 = vmatpush1.bf16.msra.mxu0 %v1157
  %1181 = vmatprep.subr.bf16.mxu0 0
  %1182 = vmatpush1.bf16.msra.mxu0 %v1158
  %1183 = vmatprep.subr.bf16.mxu0 0
  %1184 = vmatpush1.bf16.msra.mxu0 0
  %1185 = vmatprep.subr.bf16.mxu0 0
  %1186 = vmatpush1.bf16.msra.mxu0 0
  %1187 = vmatprep.subr.bf16.mxu0 0
  %1188 = vmatpush1.bf16.msra.mxu0 0
  %1189 = vmatprep.subr.bf16.mxu0 0
  %1190 = vmatpush1.bf16.msra.mxu0 0
  %1191 = vmatprep.subr.bf16.mxu0 0
  %1192 = vmatpush1.bf16.msra.mxu0 0
  %1193 = vmatprep.subr.bf16.mxu0 0
  %1194 = vmatpush1.bf16.msra.mxu0 0
  %1195 = vmatprep.subr.bf16.mxu0 0
  %1196 = vmatpush1.bf16.msra.mxu0 0
  %1197 = vmatprep.subr.bf16.mxu0 0
  %1198 = vmatpush1.bf16.msra.mxu0 0
  %1199 = vmatprep.mubr.bf16.mxu0 0
  %1200 = vmatmul.mubr.bf16.gmra.mrb[0].mxu0 %v1115
  %v1201 = vpop.f32.mrb[0].mxu0
  %v1202 = vadd.f32 0.0, %v1201
  %v1203 = vpop.f32.mrb[0].mxu0
  %v1204 = vpop.f32.mrb[0].mxu0
  %v1205 = vadd.f32 0.0, %v1204
  %v1206 = vpop.f32.mrb[0].mxu0
  %1207 = vmatprep.mubr.bf16.mxu0 0
  %1208 = vmatmul.mubr.bf16.gmra.mrb[0].mxu0 %v1116
  %v1209 = vpop.f32.mrb[0].mxu0
  %v1210 = vadd.f32 0.0, %v1209
  %v1211 = vpop.f32.mrb[0].mxu0
  %v1212 = vpop.f32.mrb[0].mxu0
  %v1213 = vadd.f32 0.0, %v1212
  %v1214 = vpop.f32.mrb[0].mxu0
  %1215 = vdwg.mxu0
  %v1216 = vadd.f32 %v1081, %v1202
  %v1217 = vadd.f32 %v1082, %v1205
  %v1218 = vadd.f32 %v1083, %v1210
  %v1219 = vadd.f32 %v1084, %v1213
  %1220 = vst [vmem:[%s2] sm:$0xff] %v1216
  %1221 = vst [vmem:[%s2 + $0x8] sm:$0xff] %v1217
  %1222 = vst [vmem:[%s2 + $0x10] sm:$0xff] %v1218
  %1223 = vst [vmem:[%s2 + $0x18] sm:$0xff] %v1219
  %v1224 = vadd.f32 %v1216, %v1217
  %v1225 = vadd.f32 %v1224, %v1218
  %v1226 = vadd.f32 %v1225, %v1219
  %v1227 = vrot.slane %v1226, 4
  %v1228 = vadd.f32 %v1226, %v1227
  %v1229 = vrot.slane %v1228, 2
  %v1230 = vadd.f32 %v1228, %v1229
  %v1231 = vrot.slane %v1230, 1
  %v1232 = vadd.f32 %v1230, %v1231
  %1233 = vst [vmem:[%s3] sm:$0xff] %v1232
  %v1234 = vmul.f32 %v1216, %v1216
  %v1235 = vmul.f32 %v1217, %v1217
  %v1236 = vmul.f32 %v1218, %v1218
  %v1237 = vmul.f32 %v1219, %v1219
  %v1238 = vadd.f32 %v1234, %v1235
  %v1239 = vadd.f32 %v1238, %v1236
  %v1240 = vadd.f32 %v1239, %v1237
  %v1241 = vrot.slane %v1240, 4
  %v1242 = vadd.f32 %v1240, %v1241
  %v1243 = vrot.slane %v1242, 2
  %v1244 = vadd.f32 %v1242, %v1243
  %v1245 = vrot.slane %v1244, 1
  %v1246 = vadd.f32 %v1244, %v1245
  %1247 = vst [vmem:[%s4] sm:$0xff] %v1246
  // Predicated region
  $region10: #{bottleneck_forward.7} parent=0 // pred_check
    _
  $region11: #{bottleneck_forward.7} parent=0 // pred_check_branch
    %1249 = sbr.rel (0) target = $region13
  $region12: #{bottleneck_forward.7} parent=0 // pred_region
    _
  $region13: #{bottleneck_forward.7} parent=0 // pred_fallthru
    _
  // Predicated region
  $region14: #{bottleneck_forward.7} parent=0 // pred_check
    _
  $region15: #{bottleneck_forward.7} parent=0 // pred_check_branch
    %1251 = sbr.rel (0) target = $region17
  $region16: #{bottleneck_forward.7} parent=0 // pred_region
    _
  $region17: #{bottleneck_forward.7} parent=0 // pred_fallthru
    _
  // Predicated region
  $region18: #{bottleneck_forward.7} parent=0 // pred_check
    _
  $region19: #{bottleneck_forward.7} parent=0 // pred_check_branch
    %1253 = sbr.rel (0) target = $region21
  $region20: #{bottleneck_forward.7} parent=0 // pred_region
    _
  $region21: #{bottleneck_forward.7} parent=0 // pred_fallthru
    _
  // Predicated region
  $region22: #{bottleneck_forward.7} parent=0 // pred_check
    _
  $region23: #{bottleneck_forward.7} parent=0 // pred_check_branch
    %1255 = sbr.rel (0) target = $region25
  $region24: #{bottleneck_forward.7} parent=0 // pred_region
    _
  $region25: #{bottleneck_forward.7} parent=0 // pred_fallthru
    _
  // Predicated region
  $region26: #{bottleneck_forward.7} parent=0 // pred_check
    _
  $region27: #{bottleneck_forward.7} parent=0 // pred_check_branch
    %1257 = sbr.rel (0) target = $region29
  $region28: #{bottleneck_forward.7} parent=0 // pred_region
    _
  $region29: #{bottleneck_forward.7} parent=0 // pred_fallthru
    _
  // Predicated region
  $region30: #{bottleneck_forward.7} parent=0 // pred_check
    _
  $region31: #{bottleneck_forward.7} parent=0 // pred_check_branch
    %1259 = sbr.rel (0) target = $region33
  $region32: #{bottleneck_forward.7} parent=0 // pred_region
    _
  $region33: #{bottleneck_forward.7} parent=0 // pred_fallthru
    _

</llo_original>
